<compile_context>
chip_gen: v7x
topology: tpu7x:2x2x1
jax: 0.10.0
libtpu: 0.0.40
codegen_flags: <defaults>
</compile_context>

<pallas_src>
import functools
import math

import jax
import jax.numpy as jnp
from jax import lax
from jax.experimental import pallas as pl
from jax.experimental.pallas import tpu as pltpu

# Same fill value as torch.finfo(torch.float).max with a minus sign.
_MASK_VALUE = -float(jnp.finfo(jnp.float32).max)


def _flash_sdpa_kernel(*refs, scale, use_bf16, has_mask):
    if has_mask:
        q_ref, k_ref, v_ref, mask_ref, o_ref, m_sc, l_sc, acc_sc = refs
    else:
        q_ref, k_ref, v_ref, o_ref, m_sc, l_sc, acc_sc = refs
        mask_ref = None

    ki = pl.program_id(2)

    @pl.when(ki == 0)
    def _init():
        m_sc[...] = jnp.full_like(m_sc, -jnp.inf)
        l_sc[...] = jnp.zeros_like(l_sc)
        acc_sc[...] = jnp.zeros_like(acc_sc)

    # Fold 1/sqrt(d_k) into q (TQ*D mults instead of TQ*TK on the score tile).
    q = q_ref[0] * scale          # (TQ, D) f32
    k = k_ref[0]                  # (TK, D)
    v = v_ref[0]                  # (TK, D)
    if use_bf16:
        q = q.astype(jnp.bfloat16)
        k = k.astype(jnp.bfloat16)
        v = v.astype(jnp.bfloat16)

    # scores = q @ k^T — contract the last dims directly (no k.T / XLU pass).
    s = lax.dot_general(q, k,
                        dimension_numbers=(((1,), (1,)), ((), ())),
                        preferred_element_type=jnp.float32)   # (TQ, TK) f32

    if mask_ref is not None:
        # masked_fill semantics: masked scores are *set* to -FLT_MAX (so a
        # fully-masked row yields uniform attention, identical to the ref).
        masked = mask_ref[0].astype(jnp.float32) != 0.0
        s = jnp.where(masked, _MASK_VALUE, s)

    # Online softmax update (statistics kept in f32).
    m_prev = m_sc[...]                                        # (TQ, 1)
    m_new = jnp.maximum(m_prev, jnp.max(s, axis=-1, keepdims=True))
    alpha = jnp.exp(m_prev - m_new)
    p = jnp.exp(s - m_new)                                    # (TQ, TK) f32
    l_sc[...] = alpha * l_sc[...] + jnp.sum(p, axis=-1, keepdims=True)

    p_mm = p.astype(jnp.bfloat16) if use_bf16 else p
    acc_sc[...] = alpha * acc_sc[...] + jnp.dot(
        p_mm, v, preferred_element_type=jnp.float32)          # (TQ, D) f32
    m_sc[...] = m_new

    @pl.when(ki == pl.num_programs(2) - 1)
    def _finalize():
        inv_l = pl.reciprocal(l_sc[...], approx=True)         # EUP vrcp
        o_ref[0] = (acc_sc[...] * inv_l).astype(o_ref.dtype)


def _pick_q_tile(s):
    # TQ is a sublane (second-to-last) dim everywhere it appears: needs %8==0
    # (or equal full extent).
    for t in (128, 64, 32, 16, 8):
        if s % t == 0:
            return t
    return s


def _pick_k_tile(s):
    # TK is the lane (last) dim of the mask tile: multiple of 128 or full S.
    return 128 if s % 128 == 0 else s


def scaled_dot_product_attention(q, k, v, mask=None, *, use_bf16_matmul=True):
    """q, k, v: (B, S, D); mask: (B, S, S) bool (True == masked) or None."""
    B, S, D = q.shape
    scale = 1.0 / math.sqrt(D)
    tq = _pick_q_tile(S)
    tk = _pick_k_tile(S)
    has_mask = mask is not None

    in_specs = [
        pl.BlockSpec((1, tq, D), lambda b, qi, ki: (b, qi, 0)),   # q
        pl.BlockSpec((1, tk, D), lambda b, qi, ki: (b, ki, 0)),   # k
        pl.BlockSpec((1, tk, D), lambda b, qi, ki: (b, ki, 0)),   # v
    ]
    inputs = [q, k, v]
    if has_mask:
        in_specs.append(
            pl.BlockSpec((1, tq, tk), lambda b, qi, ki: (b, qi, ki)))  # mask
        inputs.append(mask.astype(jnp.int8))   # 1 byte/elem HBM stream

    kernel = functools.partial(_flash_sdpa_kernel, scale=scale,
                               use_bf16=use_bf16_matmul, has_mask=has_mask)

    return pl.pallas_call(
        kernel,
        out_shape=jax.ShapeDtypeStruct((B, S, D), q.dtype),
        grid_spec=pltpu.PrefetchScalarGridSpec(
            num_scalar_prefetch=0,
            grid=(B, S // tq, S // tk),          # kv (reduction) axis last
            in_specs=in_specs,
            out_specs=pl.BlockSpec((1, tq, D), lambda b, qi, ki: (b, qi, 0)),
            scratch_shapes=[
                pltpu.VMEM((tq, 1), jnp.float32),   # running row max
                pltpu.VMEM((tq, 1), jnp.float32),   # running denom
                pltpu.VMEM((tq, D), jnp.float32),   # output accumulator
            ],
        ),
        compiler_params=pltpu.CompilerParams(
            dimension_semantics=("parallel", "parallel", "arbitrary"),
            # Tiles use well under 1 MiB here; explicit limit keeps the budget
            # inside v7x's 64 MiB physical VMEM (and v5e/v6e's 128 MiB).
            vmem_limit_bytes=32 * 1024 * 1024,
        ),
    )(*inputs)


def _reference(q, k, v, mask):
    d_k = q.shape[-1]
    scores = jnp.einsum("bqd,bkd->bqk", q, k) / math.sqrt(d_k)
    if mask is not None:
        scores = jnp.where(mask, -jnp.finfo(jnp.float32).max, scores)
    attn = jax.nn.softmax(scores, axis=2)
    return jnp.einsum("bqk,bkd->bqd", attn, v)


def _run_case(B, S, D, key, atol, with_mask=True):
    kq, kk, kv, km = jax.random.split(key, 4)
    q = jax.random.normal(kq, (B, S, D), dtype=jnp.float32)
    k = jax.random.normal(kk, (B, S, D), dtype=jnp.float32)
    v = jax.random.normal(kv, (B, S, D), dtype=jnp.float32)
    mask = (jax.random.uniform(km, (B, S, S)) < 0.2) if with_mask else None

    out = scaled_dot_product_attention(q, k, v, mask)
    out = jax.block_until_ready(out)

    ref = _reference(q, k, v, mask)
    assert out.shape == (B, S, D)
    err = float(jnp.max(jnp.abs(out - ref)))
    # bf16 MXU operands (f32 accumulation / f32 softmax stats) -> loosened tol.
    assert jnp.allclose(out, ref, atol=atol, rtol=atol), f"max abs err {err}"


if __name__ == "__main__":
    key = jax.random.PRNGKey(0)
    k1, k2, k3 = jax.random.split(key, 3)
    # Main case: exercises flash tiling + online softmax (grid 2x2x2), D=128.
    _run_case(B=2, S=256, D=128, key=k1, atol=3e-2)
    # Small case: exercises the full-sequence-per-tile fallback path.
    _run_case(B=2, S=8, D=32, key=k2, atol=3e-2)
    # mask=None path: exercises the kernel variant with no S^2 mask stream.
    _run_case(B=2, S=128, D=128, key=k3, atol=3e-2, with_mask=False)
    print("KERNEL_OK")
</pallas_src>

<mosaic_0001>
module attributes {stable_mosaic.version = 11 : i64} {
  func.func @_flash_sdpa_kernel(%arg0: i32, %arg1: i32, %arg2: i32, %arg3: memref<1x128x128xf32, #tpu.memory_space<vmem>>, %arg4: memref<1x128x128xf32, #tpu.memory_space<vmem>>, %arg5: memref<1x128x128xf32, #tpu.memory_space<vmem>>, %arg6: memref<1x128x128xi8, #tpu.memory_space<vmem>>, %arg7: memref<1x128x128xf32, #tpu.memory_space<vmem>>, %arg8: memref<128x1xf32, #tpu.memory_space<vmem>>, %arg9: memref<128x1xf32, #tpu.memory_space<vmem>>, %arg10: memref<128x128xf32, #tpu.memory_space<vmem>>) attributes {dimension_semantics = [#tpu.dimension_semantics<parallel>, #tpu.dimension_semantics<parallel>, #tpu.dimension_semantics<arbitrary>], iteration_bounds = array<i64: 2, 2, 2>, scalar_prefetch = 0 : i64, scratch_operands = 3 : i64, tpu.core_type = #tpu.core_type<tc>, window_params = [{transform_indices = @transform_0, window_bounds = array<i64: 1, 128, 128>}, {transform_indices = @transform_1, window_bounds = array<i64: 1, 128, 128>}, {transform_indices = @transform_2, window_bounds = array<i64: 1, 128, 128>}, {transform_indices = @transform_3, window_bounds = array<i64: 1, 128, 128>}, {transform_indices = @transform_4, window_bounds = array<i64: 1, 128, 128>}]} {
    %c0_i32 = arith.constant 0 : i32
    %0 = arith.cmpi eq, %arg2, %c0_i32 : i32
    %1 = arith.extui %0 : i1 to i32
    %c0_i32_0 = arith.constant 0 : i32
    %2 = arith.cmpi ne, %1, %c0_i32_0 : i32
    scf.if %2 {
      %cst_31 = arith.constant 0xFF800000 : f32
      %48 = vector.broadcast %cst_31 : f32 to vector<128x1xf32>
      %c0_32 = arith.constant 0 : index
      %c0_33 = arith.constant 0 : index
      %49 = vector.load %arg8[%c0_32, %c0_33] : memref<128x1xf32, #tpu.memory_space<vmem>>, vector<128x1xf32>
      tpu.vector_store %arg8[%c0_32, %c0_33], %48 {strides = array<i32>} : memref<128x1xf32, #tpu.memory_space<vmem>>, vector<128x1xf32>,
      %cst_34 = arith.constant 0.000000e+00 : f32
      %50 = vector.broadcast %cst_34 : f32 to vector<128x1xf32>
      %c0_35 = arith.constant 0 : index
      %c0_36 = arith.constant 0 : index
      %51 = vector.load %arg9[%c0_35, %c0_36] : memref<128x1xf32, #tpu.memory_space<vmem>>, vector<128x1xf32>
      tpu.vector_store %arg9[%c0_35, %c0_36], %50 {strides = array<i32>} : memref<128x1xf32, #tpu.memory_space<vmem>>, vector<128x1xf32>,
      %cst_37 = arith.constant 0.000000e+00 : f32
      %52 = vector.broadcast %cst_37 : f32 to vector<128x128xf32>
      %c0_38 = arith.constant 0 : index
      %c0_39 = arith.constant 0 : index
      %53 = vector.load %arg10[%c0_38, %c0_39] : memref<128x128xf32, #tpu.memory_space<vmem>>, vector<128x128xf32>
      tpu.vector_store %arg10[%c0_38, %c0_39], %52 {strides = array<i32>} : memref<128x128xf32, #tpu.memory_space<vmem>>, vector<128x128xf32>,
    } else {
    }
    %c0 = arith.constant 0 : index
    %c0_1 = arith.constant 0 : index
    %c0_2 = arith.constant 0 : index
    %3 = vector.load %arg3[%c0, %c0_1, %c0_2] : memref<1x128x128xf32, #tpu.memory_space<vmem>>, vector<1x128x128xf32>
    %4 = vector.shape_cast %3 : vector<1x128x128xf32> to vector<128x128xf32>
    %cst = arith.constant 0.0883883461 : f32
    %5 = vector.broadcast %cst : f32 to vector<128x128xf32>
    %6 = arith.mulf %4, %5 : vector<128x128xf32>
    %c0_3 = arith.constant 0 : index
    %c0_4 = arith.constant 0 : index
    %c0_5 = arith.constant 0 : index
    %7 = vector.load %arg4[%c0_3, %c0_4, %c0_5] : memref<1x128x128xf32, #tpu.memory_space<vmem>>, vector<1x128x128xf32>
    %8 = vector.shape_cast %7 : vector<1x128x128xf32> to vector<128x128xf32>
    %c0_6 = arith.constant 0 : index
    %c0_7 = arith.constant 0 : index
    %c0_8 = arith.constant 0 : index
    %9 = vector.load %arg5[%c0_6, %c0_7, %c0_8] : memref<1x128x128xf32, #tpu.memory_space<vmem>>, vector<1x128x128xf32>
    %10 = vector.shape_cast %9 : vector<1x128x128xf32> to vector<128x128xf32>
    %11 = arith.truncf %6 : vector<128x128xf32> to vector<128x128xbf16>
    %12 = arith.truncf %8 : vector<128x128xf32> to vector<128x128xbf16>
    %13 = arith.truncf %10 : vector<128x128xf32> to vector<128x128xbf16>
    %cst_9 = arith.constant dense<0.000000e+00> : vector<128x128xf32>
    %14 = tpu.matmul %11, %12, %cst_9 {dimension_numbers = #tpu.dot_dimension_numbers<[1], [1], [0], [0], [0, 0, 1, 0], [], []>} : vector<128x128xbf16>, vector<128x128xbf16>, vector<128x128xf32> -> vector<128x128xf32>
    %c0_10 = arith.constant 0 : index
    %c0_11 = arith.constant 0 : index
    %c0_12 = arith.constant 0 : index
    %15 = vector.load %arg6[%c0_10, %c0_11, %c0_12] : memref<1x128x128xi8, #tpu.memory_space<vmem>>, vector<1x128x128xi8>
    %16 = vector.shape_cast %15 : vector<1x128x128xi8> to vector<128x128xi8>
    %17 = arith.sitofp %16 : vector<128x128xi8> to vector<128x128xf32>
    %cst_13 = arith.constant 0.000000e+00 : f32
    %18 = vector.broadcast %cst_13 : f32 to vector<128x128xf32>
    %19 = arith.cmpf one, %17, %18 : vector<128x128xf32>
    %cst_14 = arith.constant -3.40282347E+38 : f32
    %20 = vector.broadcast %cst_14 : f32 to vector<128x128xf32>
    %21 = arith.select %19, %20, %14 : vector<128x128xi1>, vector<128x128xf32>
    %c0_15 = arith.constant 0 : index
    %c0_16 = arith.constant 0 : index
    %22 = vector.load %arg8[%c0_15, %c0_16] : memref<128x1xf32, #tpu.memory_space<vmem>>, vector<128x1xf32>
    %cst_17 = arith.constant dense<0xFF800000> : vector<128xf32>
    %23 = vector.multi_reduction <maximumf>, %21, %cst_17 [1] : vector<128x128xf32> to vector<128xf32>
    %24 = vector.shape_cast %23 : vector<128xf32> to vector<128x1xf32>
    %25 = arith.maximumf %22, %24 : vector<128x1xf32>
    %26 = arith.subf %22, %25 : vector<128x1xf32>
    %27 = math.exp %26 : vector<128x1xf32>
    %28 = vector.broadcast %25 : vector<128x1xf32> to vector<128x128xf32>
    %29 = arith.subf %21, %28 : vector<128x128xf32>
    %30 = math.exp %29 : vector<128x128xf32>
    %c0_18 = arith.constant 0 : index
    %c0_19 = arith.constant 0 : index
    %31 = vector.load %arg9[%c0_18, %c0_19] : memref<128x1xf32, #tpu.memory_space<vmem>>, vector<128x1xf32>
    %32 = arith.mulf %27, %31 : vector<128x1xf32>
    %cst_20 = arith.constant dense<0.000000e+00> : vector<128xf32>
    %33 = vector.multi_reduction <add>, %30, %cst_20 [1] : vector<128x128xf32> to vector<128xf32>
    %34 = vector.shape_cast %33 : vector<128xf32> to vector<128x1xf32>
    %35 = arith.addf %32, %34 : vector<128x1xf32>
    %c0_21 = arith.constant 0 : index
    %c0_22 = arith.constant 0 : index
    %36 = vector.load %arg9[%c0_21, %c0_22] : memref<128x1xf32, #tpu.memory_space<vmem>>, vector<128x1xf32>
    tpu.vector_store %arg9[%c0_21, %c0_22], %35 {strides = array<i32>} : memref<128x1xf32, #tpu.memory_space<vmem>>, vector<128x1xf32>,
    %37 = arith.truncf %30 : vector<128x128xf32> to vector<128x128xbf16>
    %c0_23 = arith.constant 0 : index
    %c0_24 = arith.constant 0 : index
    %38 = vector.load %arg10[%c0_23, %c0_24] : memref<128x128xf32, #tpu.memory_space<vmem>>, vector<128x128xf32>
    %39 = vector.broadcast %27 : vector<128x1xf32> to vector<128x128xf32>
    %40 = arith.mulf %39, %38 : vector<128x128xf32>
    %cst_25 = arith.constant dense<0.000000e+00> : vector<128x128xf32>
    %41 = tpu.matmul %37, %13, %cst_25 {dimension_numbers = #tpu.dot_dimension_numbers<[1], [0], [0], [1], [0, 0, 1, 1], [], []>} : vector<128x128xbf16>, vector<128x128xbf16>, vector<128x128xf32> -> vector<128x128xf32>
    %42 = arith.addf %40, %41 : vector<128x128xf32>
    %c0_26 = arith.constant 0 : index
    %c0_27 = arith.constant 0 : index
    %43 = vector.load %arg10[%c0_26, %c0_27] : memref<128x128xf32, #tpu.memory_space<vmem>>, vector<128x128xf32>
    tpu.vector_store %arg10[%c0_26, %c0_27], %42 {strides = array<i32>} : memref<128x128xf32, #tpu.memory_space<vmem>>, vector<128x128xf32>,
    %c0_28 = arith.constant 0 : index
    %c0_29 = arith.constant 0 : index
    %44 = vector.load %arg8[%c0_28, %c0_29] : memref<128x1xf32, #tpu.memory_space<vmem>>, vector<128x1xf32>
    tpu.vector_store %arg8[%c0_28, %c0_29], %25 {strides = array<i32>} : memref<128x1xf32, #tpu.memory_space<vmem>>, vector<128x1xf32>,
    %c1_i32 = arith.constant 1 : i32
    %45 = arith.cmpi eq, %arg2, %c1_i32 : i32
    %46 = arith.extui %45 : i1 to i32
    %c0_i32_30 = arith.constant 0 : i32
    %47 = arith.cmpi ne, %46, %c0_i32_30 : i32
    scf.if %47 {
      %c0_31 = arith.constant 0 : index
      %c0_32 = arith.constant 0 : index
      %48 = vector.load %arg9[%c0_31, %c0_32] : memref<128x1xf32, #tpu.memory_space<vmem>>, vector<128x1xf32>
      %49 = tpu.reciprocal %48 {approx = true} : vector<128x1xf32> -> vector<128x1xf32>
      %c0_33 = arith.constant 0 : index
      %c0_34 = arith.constant 0 : index
      %50 = vector.load %arg10[%c0_33, %c0_34] : memref<128x128xf32, #tpu.memory_space<vmem>>, vector<128x128xf32>
      %51 = vector.broadcast %49 : vector<128x1xf32> to vector<128x128xf32>
      %52 = arith.mulf %50, %51 : vector<128x128xf32>
      %c0_35 = arith.constant 0 : index
      %c0_36 = arith.constant 0 : index
      %c0_37 = arith.constant 0 : index
      %53 = vector.load %arg7[%c0_35, %c0_36, %c0_37] : memref<1x128x128xf32, #tpu.memory_space<vmem>>, vector<1x128x128xf32>
      %54 = vector.shape_cast %53 : vector<1x128x128xf32> to vector<128x128xf32>
      %55 = vector.shape_cast %52 : vector<128x128xf32> to vector<1x128x128xf32>
      tpu.vector_store %arg7[%c0_35, %c0_36, %c0_37], %55 {strides = array<i32>} : memref<1x128x128xf32, #tpu.memory_space<vmem>>, vector<1x128x128xf32>,
    } else {
    }
    return
  }
  func.func @transform_0(%arg0: i32, %arg1: i32, %arg2: i32) -> (i32, i32, i32) {
    %c0_i32 = arith.constant 0 : i32
    %c0_i32_0 = arith.constant 0 : i32
    return %arg0, %arg1, %c0_i32 : i32, i32, i32
  }
  func.func @transform_1(%arg0: i32, %arg1: i32, %arg2: i32) -> (i32, i32, i32) {
    %c0_i32 = arith.constant 0 : i32
    %c0_i32_0 = arith.constant 0 : i32
    return %arg0, %arg2, %c0_i32 : i32, i32, i32
  }
  func.func @transform_2(%arg0: i32, %arg1: i32, %arg2: i32) -> (i32, i32, i32) {
    %c0_i32 = arith.constant 0 : i32
    %c0_i32_0 = arith.constant 0 : i32
    return %arg0, %arg2, %c0_i32 : i32, i32, i32
  }
  func.func @transform_3(%arg0: i32, %arg1: i32, %arg2: i32) -> (i32, i32, i32) {
    %c0_i32 = arith.constant 0 : i32
    return %arg0, %arg1, %arg2 : i32, i32, i32
  }
  func.func @transform_4(%arg0: i32, %arg1: i32, %arg2: i32) -> (i32, i32, i32) {
    %c0_i32 = arith.constant 0 : i32
    %c0_i32_0 = arith.constant 0 : i32
    return %arg0, %arg1, %c0_i32 : i32, i32, i32
  }
}

</mosaic_0001>

<llo_original>
// kernel: tpu_custom_call.1
$region0: #{tpu_custom_call.1}
  #allocation0 [shape = 'u32[]', space=smem, size = 0x4, offset = 0x4, fixed_abs, tag = 'smem constant byte address 0x4 - core index']
  #allocation1 [shape = 'u32[144,128]{1,0:T(1,128)}', space=vmem, size = 0x12000, scoped, tag = 'internal scratch']
  #allocation2 [shape = 'f32[128,1]{1,0:T(8,128)}', space=vmem, size = 0x10000, scoped, tag = 'scratch operand']
  #allocation3 [shape = 'f32[128,1]{1,0:T(8,128)}', space=vmem, size = 0x10000, scoped, tag = 'scratch operand']
  #allocation4 [shape = 'f32[128,128]{1,0:T(8,128)}', space=vmem, size = 0x10000, scoped, tag = 'scratch operand']
  %s0 = inlined_call_operand.hbm [shape: f32[2,256,128], index: 0, kind: input, shape index: {}]
  %s1 = inlined_call_operand.hbm [shape: f32[2,256,128], index: 1, kind: input, shape index: {}]
  %s2 = inlined_call_operand.hbm [shape: f32[2,256,128], index: 2, kind: input, shape index: {}]
  %s3 = inlined_call_operand.hbm [shape: s8[2,256,256], index: 3, kind: input, shape index: {}]
  %s4 = inlined_call_operand.hbm [shape: f32[2,256,128], index: 4, kind: output, shape index: {}]
  %s5 = sld [smem:[#allocation0]]
  $region73: #{tpu_custom_call.1} parent=0
    _
  %s7 = ssub.s32 1, %s5
  %s8 = scalar_select 0, %s7, %s5
  $region1: #{tpu_custom_call.1} parent=0
    #allocation5 [shape = 'u8[131072]{0}', space=vmem, size = 0x20000, scoped, tag = 'input window, operand 0']
    #allocation6 [shape = 's32[2]{0}', space=sflag, size = 0x8, scoped, tag = 'scoped memory for tpu_custom_call.1']
    #allocation7 [shape = 's32[2]{0}', space=sflag, size = 0x8, scoped, tag = 'scoped memory for tpu_custom_call.1']
    #allocation8 [shape = 'u8[131072]{0}', space=vmem, size = 0x20000, scoped, tag = 'input window, operand 1']
    #allocation9 [shape = 's32[2]{0}', space=sflag, size = 0x8, scoped, tag = 'scoped memory for tpu_custom_call.1']
    #allocation10 [shape = 'u8[131072]{0}', space=vmem, size = 0x20000, scoped, tag = 'input window, operand 2']
    #allocation11 [shape = 'u8[32768]{0}', space=vmem, size = 0x8000, scoped, tag = 'input window, operand 3']
    #allocation12 [shape = 's32[2]{0}', space=sflag, size = 0x8, scoped, tag = 'scoped memory for tpu_custom_call.1']
    #allocation13 [shape = 'u8[131072]{0}', space=vmem, size = 0x20000, scoped, tag = 'output window, operand 0']
    %9 = vsyncpa [#allocation6], 0
    %s10 = scalar_lea.sflag [#allocation6], 1
    %11 = vsyncpa %s10, 0
    %12 = vsyncpa [#allocation9], 0
    %s13 = scalar_lea.sflag [#allocation9], 1
    %14 = vsyncpa %s13, 0
    %15 = vsyncpa [#allocation12], 0
    %s16 = scalar_lea.sflag [#allocation12], 1
    %17 = vsyncpa %s16, 0
    %18 = vsyncpa [#allocation7], 0
    %s19 = scalar_lea.sflag [#allocation7], 1
    %20 = vsyncpa %s19, 0
    loop: start=0, step=1, limit=10
    $region2: #{tpu_custom_call.1} parent=1 // loop_pre_header
      _
    $region3: #{tpu_custom_call.1} parent=1 // loop_header
      %s22 = sphi 0, %s26
      %p23 = scmp.ge.s32.totalorder %s22, 10
      %s29 = sphi 0, %s48
      %s30 = sphi 0, %s44
      %s31 = sphi 0, %s40
      %s32 = sphi 0, %s29
      %s33 = sphi 0, %s30
      %s34 = sphi 0, %s31
      %s35 = sphi 0, %s32
      %s36 = sphi 0, %s33
      %s37 = sphi 0, %s34
      %s53 = sphi 0, %s55
      %s56 = sphi 0, %s53
      %s57 = sphi 0, %s56
      %s73 = sphi 0, %s57
      %s81 = sphi 0, %s83
      %s84 = sphi 0, %s81
      %s85 = sphi 0, %s84
      %s101 = sphi 0, %s85
      %s109 = sphi 0, %s111
      %s112 = sphi 0, %s109
      %s113 = sphi 0, %s112
      %s129 = sphi 0, %s113
      %s139 = sphi 0, %s141
      %s142 = sphi 0, %s139
      %s143 = sphi 0, %s142
      %s159 = sphi 0, %s143
      %s167 = sphi 0, %s169
      %s170 = sphi 0, %s167
      %s171 = sphi 0, %s170
      %s187 = sphi 0, %s171
    $region4: #{tpu_custom_call.1} parent=1 // loop_header_branch
      %25 = sbr.rel (%p23) target = $region8
    $region5: #{tpu_custom_call.1} parent=1 // loop_body
      %s27 = ssub.s32 %s22, 1
      %s28 = ssub.s32 %s22, 2
      %s38 = sadd.s32 1, %s31
      %p39 = scmp.ge.s32.totalorder %s38, 2
      %s40 = scalar_select %p39, 0, %s38
      %s41 = sadd.s32 1, %s30
      %s42 = scalar_select %p39, %s41, %s30
      %p43 = scmp.ge.s32.totalorder %s42, 2
      %s44 = scalar_select %p43, 0, %s42
      %s45 = sadd.s32 1, %s29
      %s46 = scalar_select %p43, %s45, %s29
      %p47 = scmp.ge.s32.totalorder %s46, 2
      %s48 = scalar_select %p47, 0, %s46
      %s49 = ssub.s32 %s29, %s48
      %s50 = ssub.s32 %s30, %s44
      %s51 = sor.u32 %s49, %s50
      %p52 = scmp.eq.s32.totalorder %s51, 0
      %s54 = sadd.s32 %s53, 1
      %s55 = scalar_select %p52, %s53, %s54
      %p58 = pneg %p52
      %p59 = scmp.eq.s32.totalorder %s22, 7
      %p60 = por %p58, %p59
      %p61 = scmp.ne.s32.totalorder %s53, %s56
      %p62 = scmp.eq.s32.totalorder %s22, 0
      %p63 = por %p61, %p62
      %p64 = scmp.ne.s32.totalorder %s53, %s56
      %p65 = scmp.eq.s32.totalorder %s27, 7
      %p66 = por %p64, %p65
      %p67 = scmp.ne.s32.totalorder %s56, %s57
      %p68 = scmp.eq.s32.totalorder %s27, 0
      %p69 = por %p67, %p68
      %p70 = scmp.ne.s32.totalorder %s56, %s57
      %p71 = scmp.eq.s32.totalorder %s28, 7
      %p72 = por %p70, %p71
      %p74 = scmp.ne.s32.totalorder %s57, %s73
      %p75 = scmp.eq.s32.totalorder %s28, 0
      %p76 = por %p74, %p75
      %s77 = ssub.s32 %s29, %s48
      %s78 = ssub.s32 %s31, %s40
      %s79 = sor.u32 %s77, %s78
      %p80 = scmp.eq.s32.totalorder %s79, 0
      %s82 = sadd.s32 %s81, 1
      %s83 = scalar_select %p80, %s81, %s82
      %p86 = pneg %p80
      %p87 = scmp.eq.s32.totalorder %s22, 7
      %p88 = por %p86, %p87
      %p89 = scmp.ne.s32.totalorder %s81, %s84
      %p90 = scmp.eq.s32.totalorder %s22, 0
      %p91 = por %p89, %p90
      %p92 = scmp.ne.s32.totalorder %s81, %s84
      %p93 = scmp.eq.s32.totalorder %s27, 7
      %p94 = por %p92, %p93
      %p95 = scmp.ne.s32.totalorder %s84, %s85
      %p96 = scmp.eq.s32.totalorder %s27, 0
      %p97 = por %p95, %p96
      %p98 = scmp.ne.s32.totalorder %s84, %s85
      %p99 = scmp.eq.s32.totalorder %s28, 7
      %p100 = por %p98, %p99
      %p102 = scmp.ne.s32.totalorder %s85, %s101
      %p103 = scmp.eq.s32.totalorder %s28, 0
      %p104 = por %p102, %p103
      %s105 = ssub.s32 %s29, %s48
      %s106 = ssub.s32 %s31, %s40
      %s107 = sor.u32 %s105, %s106
      %p108 = scmp.eq.s32.totalorder %s107, 0
      %s110 = sadd.s32 %s109, 1
      %s111 = scalar_select %p108, %s109, %s110
      %p114 = pneg %p108
      %p115 = scmp.eq.s32.totalorder %s22, 7
      %p116 = por %p114, %p115
      %p117 = scmp.ne.s32.totalorder %s109, %s112
      %p118 = scmp.eq.s32.totalorder %s22, 0
      %p119 = por %p117, %p118
      %p120 = scmp.ne.s32.totalorder %s109, %s112
      %p121 = scmp.eq.s32.totalorder %s27, 7
      %p122 = por %p120, %p121
      %p123 = scmp.ne.s32.totalorder %s112, %s113
      %p124 = scmp.eq.s32.totalorder %s27, 0
      %p125 = por %p123, %p124
      %p126 = scmp.ne.s32.totalorder %s112, %s113
      %p127 = scmp.eq.s32.totalorder %s28, 7
      %p128 = por %p126, %p127
      %p130 = scmp.ne.s32.totalorder %s113, %s129
      %p131 = scmp.eq.s32.totalorder %s28, 0
      %p132 = por %p130, %p131
      %s133 = ssub.s32 %s29, %s48
      %s134 = ssub.s32 %s30, %s44
      %s135 = sor.u32 %s133, %s134
      %s136 = ssub.s32 %s31, %s40
      %s137 = sor.u32 %s135, %s136
      %p138 = scmp.eq.s32.totalorder %s137, 0
      %s140 = sadd.s32 %s139, 1
      %s141 = scalar_select %p138, %s139, %s140
      %p144 = pneg %p138
      %p145 = scmp.eq.s32.totalorder %s22, 7
      %p146 = por %p144, %p145
      %p147 = scmp.ne.s32.totalorder %s139, %s142
      %p148 = scmp.eq.s32.totalorder %s22, 0
      %p149 = por %p147, %p148
      %p150 = scmp.ne.s32.totalorder %s139, %s142
      %p151 = scmp.eq.s32.totalorder %s27, 7
      %p152 = por %p150, %p151
      %p153 = scmp.ne.s32.totalorder %s142, %s143
      %p154 = scmp.eq.s32.totalorder %s27, 0
      %p155 = por %p153, %p154
      %p156 = scmp.ne.s32.totalorder %s142, %s143
      %p157 = scmp.eq.s32.totalorder %s28, 7
      %p158 = por %p156, %p157
      %p160 = scmp.ne.s32.totalorder %s143, %s159
      %p161 = scmp.eq.s32.totalorder %s28, 0
      %p162 = por %p160, %p161
      %s163 = ssub.s32 %s29, %s48
      %s164 = ssub.s32 %s30, %s44
      %s165 = sor.u32 %s163, %s164
      %p166 = scmp.eq.s32.totalorder %s165, 0
      %s168 = sadd.s32 %s167, 1
      %s169 = scalar_select %p166, %s167, %s168
      %p172 = pneg %p166
      %p173 = scmp.eq.s32.totalorder %s22, 7
      %p174 = por %p172, %p173
      %p175 = scmp.ne.s32.totalorder %s167, %s170
      %p176 = scmp.eq.s32.totalorder %s22, 0
      %p177 = por %p175, %p176
      %p178 = scmp.ne.s32.totalorder %s167, %s170
      %p179 = scmp.eq.s32.totalorder %s27, 7
      %p180 = por %p178, %p179
      %p181 = scmp.ne.s32.totalorder %s170, %s171
      %p182 = scmp.eq.s32.totalorder %s27, 0
      %p183 = por %p181, %p182
      %p184 = scmp.ne.s32.totalorder %s170, %s171
      %p185 = scmp.eq.s32.totalorder %s28, 7
      %p186 = por %p184, %p185
      %p188 = scmp.ne.s32.totalorder %s171, %s187
      %p189 = scmp.eq.s32.totalorder %s28, 0
      %p190 = por %p188, %p189
      %p191 = scmp.le.s32.totalorder 1, %s22
      %p192 = scmp.lt.s32.totalorder %s22, 9
      %p193 = pnand %p191, %p192
      %p194 = pneg %p193
      // Predicated region
      $region9: #{tpu_custom_call.1} parent=5 // pred_check
        _
      $region10: #{tpu_custom_call.1} parent=5 // pred_check_branch
        %196 = sbr.rel (%p193) target = $region12
      $region11: #{tpu_custom_call.1} parent=5 // pred_region
        %s197 = ssub.s32 %s22, 1
      $region12: #{tpu_custom_call.1} parent=5 // pred_fallthru
        _
      %p198 = scmp.lt.s32.totalorder %s22, 8
      // Predicated region
      $region13: #{tpu_custom_call.1} parent=5 // pred_check
        %p199 = pneg %p198
      $region14: #{tpu_custom_call.1} parent=5 // pred_check_branch
        %201 = sbr.rel (%p199) target = $region16
      $region15: #{tpu_custom_call.1} parent=5 // pred_region
        // Predicated region
        $region17: #{tpu_custom_call.1} parent=15 // pred_check
          %p202 = pneg %p63
        $region18: #{tpu_custom_call.1} parent=15 // pred_check_branch
          %204 = sbr.rel (%p202) target = $region20
        $region19: #{tpu_custom_call.1} parent=15 // pred_region
          %s205 = sand.u32 %s53, 1
          %s206 = scalar_lea.sflag [#allocation6], %s205
          %s207 = sand.u32 %s53, 1
          %s208 = smul.addr %s207, 128
          %s209 = scalar_lea.vmem [#allocation5], %s208
          %s210 = smul.u32 16, %s30
          %s212 = ssub.s32 2048, 2048
          %213 = vsyncadd %s206, %s212
          %s214 = smul.addr %s29, 32
          %s215 = sadd.s32 %s210, %s214
          %s216 = smul.addr %s215, 128
          %s217 = scalar_lea.hbm %s0, %s216
          %s218 = sshll.u32 %s209, 4
          %s219 = int_to_ptr.vmem [resolvable:$true] %s218
          %224 = dma.hbm_to_vmem [thread:$0]  %s217, 2048, %s219, %s206, 128, 128, 8
        $region20: #{tpu_custom_call.1} parent=15 // pred_fallthru
          _
        // Predicated region
        $region21: #{tpu_custom_call.1} parent=15 // pred_check
          %p225 = pneg %p91
        $region22: #{tpu_custom_call.1} parent=15 // pred_check_branch
          %227 = sbr.rel (%p225) target = $region24
        $region23: #{tpu_custom_call.1} parent=15 // pred_region
          %s228 = sand.u32 %s22, 1
          %s229 = scalar_lea.sflag [#allocation9], %s228
          %s230 = sand.u32 %s81, 1
          %s231 = smul.addr %s230, 128
          %s232 = scalar_lea.vmem [#allocation8], %s231
          %s233 = smul.u32 16, %s31
          %s235 = ssub.s32 2048, 2048
          %236 = vsyncadd %s229, %s235
          %s237 = smul.addr %s29, 32
          %s238 = sadd.s32 %s233, %s237
          %s239 = smul.addr %s238, 128
          %s240 = scalar_lea.hbm %s1, %s239
          %s241 = sshll.u32 %s232, 4
          %s242 = int_to_ptr.vmem [resolvable:$true] %s241
          %247 = dma.hbm_to_vmem [thread:$0]  %s240, 2048, %s242, %s229, 128, 128, 8
        $region24: #{tpu_custom_call.1} parent=15 // pred_fallthru
          _
        // Predicated region
        $region25: #{tpu_custom_call.1} parent=15 // pred_check
          %p248 = pneg %p119
        $region26: #{tpu_custom_call.1} parent=15 // pred_check_branch
          %250 = sbr.rel (%p248) target = $region28
        $region27: #{tpu_custom_call.1} parent=15 // pred_region
          %s251 = sand.u32 %s22, 1
          %s252 = scalar_lea.sflag [#allocation9], %s251
          %s253 = sand.u32 %s109, 1
          %s254 = smul.addr %s253, 128
          %s255 = scalar_lea.vmem [#allocation10], %s254
          %s256 = smul.u32 16, %s31
          %s258 = ssub.s32 2048, 2048
          %259 = vsyncadd %s252, %s258
          %s260 = smul.addr %s29, 32
          %s261 = sadd.s32 %s256, %s260
          %s262 = smul.addr %s261, 128
          %s263 = scalar_lea.hbm %s2, %s262
          %s264 = sshll.u32 %s255, 4
          %s265 = int_to_ptr.vmem [resolvable:$true] %s264
          %270 = dma.hbm_to_vmem [thread:$0]  %s263, 2048, %s265, %s252, 128, 128, 8
        $region28: #{tpu_custom_call.1} parent=15 // pred_fallthru
          _
        // Predicated region
        $region29: #{tpu_custom_call.1} parent=15 // pred_check
          %p271 = pneg %p149
        $region30: #{tpu_custom_call.1} parent=15 // pred_check_branch
          %273 = sbr.rel (%p271) target = $region32
        $region31: #{tpu_custom_call.1} parent=15 // pred_region
          %s274 = sand.u32 %s139, 1
          %s275 = scalar_lea.sflag [#allocation12], %s274
          %s276 = sand.u32 %s139, 1
          %s277 = smul.addr %s276, 32
          %s278 = scalar_lea.vmem [#allocation11], %s277
          %s279 = smul.u32 4, %s30
          %s281 = ssub.s32 512, 512
          %282 = vsyncadd %s275, %s281
          %s283 = smul.addr %s279, 2
          %s284 = sadd.s32 %s31, %s283
          %s285 = smul.addr %s29, 16
          %s286 = sadd.s32 %s284, %s285
          %s287 = smul.addr %s286, 128
          %s288 = scalar_lea.hbm %s3, %s287
          %s289 = sshll.u32 %s278, 4
          %s290 = int_to_ptr.vmem [resolvable:$true] %s289
          %295 = dma.hbm_to_vmem [thread:$0]  %s288, 512, %s290, %s275, 256, 128, 8
        $region32: #{tpu_custom_call.1} parent=15 // pred_fallthru
          _
      $region16: #{tpu_custom_call.1} parent=5 // pred_fallthru
        _
      %p296 = scmp.le.s32.totalorder 1, %s22
      %p297 = scmp.lt.s32.totalorder %s22, 9
      %p298 = pnand %p296, %p297
      %p299 = pneg %p298
      // Predicated region
      $region33: #{tpu_custom_call.1} parent=5 // pred_check
        _
      $region34: #{tpu_custom_call.1} parent=5 // pred_check_branch
        %301 = sbr.rel (%p298) target = $region36
      $region35: #{tpu_custom_call.1} parent=5 // pred_region
        %s302 = ssub.s32 %s22, 1
        %s303 = sand.u32 %s56, 1
        %s304 = scalar_lea.sflag [#allocation6], %s303
        %s305 = sand.u32 %s56, 1
        %s306 = smul.addr %s305, 128
        %s307 = scalar_lea.vmem [#allocation5], %s306
        // Predicated region
        $region37: #{tpu_custom_call.1} parent=35 // pred_check
          %p308 = pneg %p69
        $region38: #{tpu_custom_call.1} parent=35 // pred_check_branch
          %310 = sbr.rel (%p308) target = $region40
        $region39: #{tpu_custom_call.1} parent=35 // pred_region
          %311 = dma.done %s304, 2048
        $region40: #{tpu_custom_call.1} parent=35 // pred_fallthru
          _
        %s312 = sand.u32 %s27, 1
        %s313 = scalar_lea.sflag [#allocation9], %s312
        %s314 = sand.u32 %s84, 1
        %s315 = smul.addr %s314, 128
        %s316 = scalar_lea.vmem [#allocation8], %s315
        // Predicated region
        $region41: #{tpu_custom_call.1} parent=35 // pred_check
          %p317 = pneg %p97
        $region42: #{tpu_custom_call.1} parent=35 // pred_check_branch
          %319 = sbr.rel (%p317) target = $region44
        $region43: #{tpu_custom_call.1} parent=35 // pred_region
          %320 = dma.done %s313, 2048
        $region44: #{tpu_custom_call.1} parent=35 // pred_fallthru
          _
        %s321 = sand.u32 %s27, 1
        %s322 = scalar_lea.sflag [#allocation9], %s321
        %s323 = sand.u32 %s112, 1
        %s324 = smul.addr %s323, 128
        %s325 = scalar_lea.vmem [#allocation10], %s324
        // Predicated region
        $region45: #{tpu_custom_call.1} parent=35 // pred_check
          %p326 = pneg %p125
        $region46: #{tpu_custom_call.1} parent=35 // pred_check_branch
          %328 = sbr.rel (%p326) target = $region48
        $region47: #{tpu_custom_call.1} parent=35 // pred_region
          %329 = dma.done %s322, 2048
        $region48: #{tpu_custom_call.1} parent=35 // pred_fallthru
          _
        %s330 = sand.u32 %s142, 1
        %s331 = scalar_lea.sflag [#allocation12], %s330
        %s332 = sand.u32 %s142, 1
        %s333 = smul.addr %s332, 32
        %s334 = scalar_lea.vmem [#allocation11], %s333
        // Predicated region
        $region49: #{tpu_custom_call.1} parent=35 // pred_check
          %p335 = pneg %p155
        $region50: #{tpu_custom_call.1} parent=35 // pred_check_branch
          %337 = sbr.rel (%p335) target = $region52
        $region51: #{tpu_custom_call.1} parent=35 // pred_region
          %338 = dma.done %s331, 512
        $region52: #{tpu_custom_call.1} parent=35 // pred_fallthru
          _
        %s339 = sand.u32 %s56, 1
        %s340 = scalar_lea.sflag [#allocation6], %s339
        %s341 = sand.u32 %s56, 1
        %s342 = smul.addr %s341, 128
        %s343 = scalar_lea.vmem [#allocation5], %s342
        %p344 = pneg %p69
        %p345 = pneg %p66
        %s346 = sand.u32 %s27, 1
        %s347 = scalar_lea.sflag [#allocation9], %s346
        %s348 = sand.u32 %s84, 1
        %s349 = smul.addr %s348, 128
        %s350 = scalar_lea.vmem [#allocation8], %s349
        %p351 = pneg %p97
        %p352 = pneg %p94
        %s353 = sand.u32 %s27, 1
        %s354 = scalar_lea.sflag [#allocation9], %s353
        %s355 = sand.u32 %s112, 1
        %s356 = smul.addr %s355, 128
        %s357 = scalar_lea.vmem [#allocation10], %s356
        %p358 = pneg %p125
        %p359 = pneg %p122
        %s360 = sand.u32 %s142, 1
        %s361 = scalar_lea.sflag [#allocation12], %s360
        %s362 = sand.u32 %s142, 1
        %s363 = smul.addr %s362, 32
        %s364 = scalar_lea.vmem [#allocation11], %s363
        %p365 = pneg %p155
        %p366 = pneg %p152
        %p367 = pneg %p183
        %p368 = pneg %p180
        %s369 = sand.u32 %s170, 1
        %s370 = scalar_lea.sflag [#allocation7], %s369
        %s371 = sand.u32 %s170, 1
        %s372 = smul.addr %s371, 128
        %s373 = scalar_lea.vmem [#allocation13], %s372
        %s374 = smul.u32 16, %s33
        %s375 = smul.u32 16, %s34
        %s376 = smul.u32 16, %s34
        %s377 = smul.u32 4, %s33
        %s378 = smul.u32 16, %s33
        %p380 = scmp.eq.s32.totalorder %s34, 0
        // Predicated region
        $region53: #{tpu_custom_call.1} parent=35 // pred_check
          %p381 = pneg %p380
        $region54: #{tpu_custom_call.1} parent=35 // pred_check_branch
          %383 = sbr.rel (%p381) target = $region56
        $region55: #{tpu_custom_call.1} parent=35 // pred_region
          %vm384 = vcmask 7168
          %385 = vst.msk [vmem:[#allocation2] sm:$0xff] %vm384, -inf
          %386 = vst.msk [vmem:[#allocation2 + $0x8] sm:$0xff] %vm384, -inf
          %387 = vst.msk [vmem:[#allocation2 + $0x10] sm:$0xff] %vm384, -inf
          %388 = vst.msk [vmem:[#allocation2 + $0x18] sm:$0xff] %vm384, -inf
          %389 = vst.msk [vmem:[#allocation2 + $0x20] sm:$0xff] %vm384, -inf
          %390 = vst.msk [vmem:[#allocation2 + $0x28] sm:$0xff] %vm384, -inf
          %391 = vst.msk [vmem:[#allocation2 + $0x30] sm:$0xff] %vm384, -inf
          %392 = vst.msk [vmem:[#allocation2 + $0x38] sm:$0xff] %vm384, -inf
          %393 = vst.msk [vmem:[#allocation2 + $0x40] sm:$0xff] %vm384, -inf
          %394 = vst.msk [vmem:[#allocation2 + $0x48] sm:$0xff] %vm384, -inf
          %395 = vst.msk [vmem:[#allocation2 + $0x50] sm:$0xff] %vm384, -inf
          %396 = vst.msk [vmem:[#allocation2 + $0x58] sm:$0xff] %vm384, -inf
          %397 = vst.msk [vmem:[#allocation2 + $0x60] sm:$0xff] %vm384, -inf
          %398 = vst.msk [vmem:[#allocation2 + $0x68] sm:$0xff] %vm384, -inf
          %399 = vst.msk [vmem:[#allocation2 + $0x70] sm:$0xff] %vm384, -inf
          %400 = vst.msk [vmem:[#allocation2 + $0x78] sm:$0xff] %vm384, -inf
          %401 = vst.msk [vmem:[#allocation3] sm:$0xff] %vm384, 0.0
          %402 = vst.msk [vmem:[#allocation3 + $0x8] sm:$0xff] %vm384, 0.0
          %403 = vst.msk [vmem:[#allocation3 + $0x10] sm:$0xff] %vm384, 0.0
          %404 = vst.msk [vmem:[#allocation3 + $0x18] sm:$0xff] %vm384, 0.0
          %405 = vst.msk [vmem:[#allocation3 + $0x20] sm:$0xff] %vm384, 0.0
          %406 = vst.msk [vmem:[#allocation3 + $0x28] sm:$0xff] %vm384, 0.0
          %407 = vst.msk [vmem:[#allocation3 + $0x30] sm:$0xff] %vm384, 0.0
          %408 = vst.msk [vmem:[#allocation3 + $0x38] sm:$0xff] %vm384, 0.0
          %409 = vst.msk [vmem:[#allocation3 + $0x40] sm:$0xff] %vm384, 0.0
          %410 = vst.msk [vmem:[#allocation3 + $0x48] sm:$0xff] %vm384, 0.0
          %411 = vst.msk [vmem:[#allocation3 + $0x50] sm:$0xff] %vm384, 0.0
          %412 = vst.msk [vmem:[#allocation3 + $0x58] sm:$0xff] %vm384, 0.0
          %413 = vst.msk [vmem:[#allocation3 + $0x60] sm:$0xff] %vm384, 0.0
          %414 = vst.msk [vmem:[#allocation3 + $0x68] sm:$0xff] %vm384, 0.0
          %415 = vst.msk [vmem:[#allocation3 + $0x70] sm:$0xff] %vm384, 0.0
          %416 = vst.msk [vmem:[#allocation3 + $0x78] sm:$0xff] %vm384, 0.0
          %417 = vst [vmem:[#allocation4] sm:$0xff] 0.0
          %418 = vst [vmem:[#allocation4 + $0x8] sm:$0xff] 0.0
          %419 = vst [vmem:[#allocation4 + $0x10] sm:$0xff] 0.0
          %420 = vst [vmem:[#allocation4 + $0x18] sm:$0xff] 0.0
          %421 = vst [vmem:[#allocation4 + $0x20] sm:$0xff] 0.0
          %422 = vst [vmem:[#allocation4 + $0x28] sm:$0xff] 0.0
          %423 = vst [vmem:[#allocation4 + $0x30] sm:$0xff] 0.0
          %424 = vst [vmem:[#allocation4 + $0x38] sm:$0xff] 0.0
          %425 = vst [vmem:[#allocation4 + $0x40] sm:$0xff] 0.0
          %426 = vst [vmem:[#allocation4 + $0x48] sm:$0xff] 0.0
          %427 = vst [vmem:[#allocation4 + $0x50] sm:$0xff] 0.0
          %428 = vst [vmem:[#allocation4 + $0x58] sm:$0xff] 0.0
          %429 = vst [vmem:[#allocation4 + $0x60] sm:$0xff] 0.0
          %430 = vst [vmem:[#allocation4 + $0x68] sm:$0xff] 0.0
          %431 = vst [vmem:[#allocation4 + $0x70] sm:$0xff] 0.0
          %432 = vst [vmem:[#allocation4 + $0x78] sm:$0xff] 0.0
        $region56: #{tpu_custom_call.1} parent=35 // pred_fallthru
          _
        %v433 = vld [vmem:[%s307] sm:$0xff]
        %v434 = vld [vmem:[%s307 + $0x8] sm:$0xff]
        %v435 = vld [vmem:[%s307 + $0x10] sm:$0xff]
        %v436 = vld [vmem:[%s307 + $0x18] sm:$0xff]
        %v437 = vld [vmem:[%s307 + $0x20] sm:$0xff]
        %v438 = vld [vmem:[%s307 + $0x28] sm:$0xff]
        %v439 = vld [vmem:[%s307 + $0x30] sm:$0xff]
        %v440 = vld [vmem:[%s307 + $0x38] sm:$0xff]
        %v441 = vld [vmem:[%s307 + $0x40] sm:$0xff]
        %v442 = vld [vmem:[%s307 + $0x48] sm:$0xff]
        %v443 = vld [vmem:[%s307 + $0x50] sm:$0xff]
        %v444 = vld [vmem:[%s307 + $0x58] sm:$0xff]
        %v445 = vld [vmem:[%s307 + $0x60] sm:$0xff]
        %v446 = vld [vmem:[%s307 + $0x68] sm:$0xff]
        %v447 = vld [vmem:[%s307 + $0x70] sm:$0xff]
        %v448 = vld [vmem:[%s307 + $0x78] sm:$0xff]
        %v449 = vmul.f32 %v433, 0.088388346
        %v450 = vmul.f32 %v434, 0.088388346
        %v451 = vmul.f32 %v435, 0.088388346
        %v452 = vmul.f32 %v436, 0.088388346
        %v453 = vmul.f32 %v437, 0.088388346
        %v454 = vmul.f32 %v438, 0.088388346
        %v455 = vmul.f32 %v439, 0.088388346
        %v456 = vmul.f32 %v440, 0.088388346
        %v457 = vmul.f32 %v441, 0.088388346
        %v458 = vmul.f32 %v442, 0.088388346
        %v459 = vmul.f32 %v443, 0.088388346
        %v460 = vmul.f32 %v444, 0.088388346
        %v461 = vmul.f32 %v445, 0.088388346
        %v462 = vmul.f32 %v446, 0.088388346
        %v463 = vmul.f32 %v447, 0.088388346
        %v464 = vmul.f32 %v448, 0.088388346
        %v465 = vld [vmem:[%s316] sm:$0xff]
        %v466 = vld [vmem:[%s316 + $0x8] sm:$0xff]
        %v467 = vld [vmem:[%s316 + $0x10] sm:$0xff]
        %v468 = vld [vmem:[%s316 + $0x18] sm:$0xff]
        %v469 = vld [vmem:[%s316 + $0x20] sm:$0xff]
        %v470 = vld [vmem:[%s316 + $0x28] sm:$0xff]
        %v471 = vld [vmem:[%s316 + $0x30] sm:$0xff]
        %v472 = vld [vmem:[%s316 + $0x38] sm:$0xff]
        %v473 = vld [vmem:[%s316 + $0x40] sm:$0xff]
        %v474 = vld [vmem:[%s316 + $0x48] sm:$0xff]
        %v475 = vld [vmem:[%s316 + $0x50] sm:$0xff]
        %v476 = vld [vmem:[%s316 + $0x58] sm:$0xff]
        %v477 = vld [vmem:[%s316 + $0x60] sm:$0xff]
        %v478 = vld [vmem:[%s316 + $0x68] sm:$0xff]
        %v479 = vld [vmem:[%s316 + $0x70] sm:$0xff]
        %v480 = vld [vmem:[%s316 + $0x78] sm:$0xff]
        %v481 = vld [vmem:[%s325] sm:$0xff]
        %v482 = vld [vmem:[%s325 + $0x8] sm:$0xff]
        %v483 = vld [vmem:[%s325 + $0x10] sm:$0xff]
        %v484 = vld [vmem:[%s325 + $0x18] sm:$0xff]
        %v485 = vld [vmem:[%s325 + $0x20] sm:$0xff]
        %v486 = vld [vmem:[%s325 + $0x28] sm:$0xff]
        %v487 = vld [vmem:[%s325 + $0x30] sm:$0xff]
        %v488 = vld [vmem:[%s325 + $0x38] sm:$0xff]
        %v489 = vld [vmem:[%s325 + $0x40] sm:$0xff]
        %v490 = vld [vmem:[%s325 + $0x48] sm:$0xff]
        %v491 = vld [vmem:[%s325 + $0x50] sm:$0xff]
        %v492 = vld [vmem:[%s325 + $0x58] sm:$0xff]
        %v493 = vld [vmem:[%s325 + $0x60] sm:$0xff]
        %v494 = vld [vmem:[%s325 + $0x68] sm:$0xff]
        %v495 = vld [vmem:[%s325 + $0x70] sm:$0xff]
        %v496 = vld [vmem:[%s325 + $0x78] sm:$0xff]
        %v497 = vpack.c.bf16 %v450, %v449
        %v498 = vpack.c.bf16 %v452, %v451
        %v499 = vpack.c.bf16 %v454, %v453
        %v500 = vpack.c.bf16 %v456, %v455
        %v501 = vpack.c.bf16 %v458, %v457
        %v502 = vpack.c.bf16 %v460, %v459
        %v503 = vpack.c.bf16 %v462, %v461
        %v504 = vpack.c.bf16 %v464, %v463
        %v505 = vpack.c.bf16 %v466, %v465
        %v506 = vpack.c.bf16 %v468, %v467
        %v507 = vpack.c.bf16 %v470, %v469
        %v508 = vpack.c.bf16 %v472, %v471
        %v509 = vpack.c.bf16 %v474, %v473
        %v510 = vpack.c.bf16 %v476, %v475
        %v511 = vpack.c.bf16 %v478, %v477
        %v512 = vpack.c.bf16 %v480, %v479
        %v513 = vpack.c.bf16 %v482, %v481
        %v514 = vpack.c.bf16 %v484, %v483
        %v515 = vpack.c.bf16 %v486, %v485
        %v516 = vpack.c.bf16 %v488, %v487
        %v517 = vpack.c.bf16 %v490, %v489
        %v518 = vpack.c.bf16 %v492, %v491
        %v519 = vpack.c.bf16 %v494, %v493
        %v520 = vpack.c.bf16 %v496, %v495
        %521 = vmatprep.subr.bf16.mxu0 0
        %522 = vmatpush1.bf16.xpose.msra.mxu0 %v505
        %523 = vmatprep.subr.bf16.mxu0 0
        %524 = vmatpush1.bf16.xpose.msra.mxu0 %v506
        %525 = vmatprep.subr.bf16.mxu0 0
        %526 = vmatpush1.bf16.xpose.msra.mxu0 %v507
        %527 = vmatprep.subr.bf16.mxu0 0
        %528 = vmatpush1.bf16.xpose.msra.mxu0 %v508
        %529 = vmatprep.subr.bf16.mxu0 0
        %530 = vmatpush1.bf16.xpose.msra.mxu0 %v509
        %531 = vmatprep.subr.bf16.mxu0 0
        %532 = vmatpush1.bf16.xpose.msra.mxu0 %v510
        %533 = vmatprep.subr.bf16.mxu0 0
        %534 = vmatpush1.bf16.xpose.msra.mxu0 %v511
        %535 = vmatprep.subr.bf16.mxu0 0
        %536 = vmatpush1.bf16.xpose.msra.mxu0 %v512
        %537 = vmatprep.subr.bf16.mxu0 0
        %538 = vmatpush1.bf16.xpose.msra.mxu0 0
        %539 = vmatprep.subr.bf16.mxu0 0
        %540 = vmatpush1.bf16.xpose.msra.mxu0 0
        %541 = vmatprep.subr.bf16.mxu0 0
        %542 = vmatpush1.bf16.xpose.msra.mxu0 0
        %543 = vmatprep.subr.bf16.mxu0 0
        %544 = vmatpush1.bf16.xpose.msra.mxu0 0
        %545 = vmatprep.subr.bf16.mxu0 0
        %546 = vmatpush1.bf16.xpose.msra.mxu0 0
        %547 = vmatprep.subr.bf16.mxu0 0
        %548 = vmatpush1.bf16.xpose.msra.mxu0 0
        %549 = vmatprep.subr.bf16.mxu0 0
        %550 = vmatpush1.bf16.xpose.msra.mxu0 0
        %551 = vmatprep.subr.bf16.mxu0 0
        %552 = vmatpush1.bf16.xpose.msra.mxu0 0
        %553 = vmatprep.mubr.bf16.mxu0 0
        %554 = vmatmul.mubr.bf16.gmra.mrb[0].mxu0 %v497
        %v555 = vpop.f32.mrb[0].mxu0
        %v556 = vadd.f32 0.0, %v555
        %v557 = vpop.f32.mrb[0].mxu0
        %v558 = vpop.f32.mrb[0].mxu0
        %v559 = vadd.f32 0.0, %v558
        %v560 = vpop.f32.mrb[0].mxu0
        %561 = vmatprep.mubr.bf16.mxu0 0
        %562 = vmatmul.mubr.bf16.gmra.mrb[0].mxu0 %v498
        %v563 = vpop.f32.mrb[0].mxu0
        %v564 = vadd.f32 0.0, %v563
        %v565 = vpop.f32.mrb[0].mxu0
        %v566 = vpop.f32.mrb[0].mxu0
        %v567 = vadd.f32 0.0, %v566
        %v568 = vpop.f32.mrb[0].mxu0
        %569 = vmatprep.mubr.bf16.mxu0 0
        %570 = vmatmul.mubr.bf16.gmra.mrb[0].mxu0 %v499
        %v571 = vpop.f32.mrb[0].mxu0
        %v572 = vadd.f32 0.0, %v571
        %v573 = vpop.f32.mrb[0].mxu0
        %v574 = vpop.f32.mrb[0].mxu0
        %v575 = vadd.f32 0.0, %v574
        %v576 = vpop.f32.mrb[0].mxu0
        %577 = vmatprep.mubr.bf16.mxu0 0
        %578 = vmatmul.mubr.bf16.gmra.mrb[0].mxu0 %v500
        %v579 = vpop.f32.mrb[0].mxu0
        %v580 = vadd.f32 0.0, %v579
        %v581 = vpop.f32.mrb[0].mxu0
        %v582 = vpop.f32.mrb[0].mxu0
        %v583 = vadd.f32 0.0, %v582
        %v584 = vpop.f32.mrb[0].mxu0
        %585 = vmatprep.mubr.bf16.mxu0 0
        %586 = vmatmul.mubr.bf16.gmra.mrb[0].mxu0 %v501
        %v587 = vpop.f32.mrb[0].mxu0
        %v588 = vadd.f32 0.0, %v587
        %v589 = vpop.f32.mrb[0].mxu0
        %v590 = vpop.f32.mrb[0].mxu0
        %v591 = vadd.f32 0.0, %v590
        %v592 = vpop.f32.mrb[0].mxu0
        %593 = vmatprep.mubr.bf16.mxu0 0
        %594 = vmatmul.mubr.bf16.gmra.mrb[0].mxu0 %v502
        %v595 = vpop.f32.mrb[0].mxu0
        %v596 = vadd.f32 0.0, %v595
        %v597 = vpop.f32.mrb[0].mxu0
        %v598 = vpop.f32.mrb[0].mxu0
        %v599 = vadd.f32 0.0, %v598
        %v600 = vpop.f32.mrb[0].mxu0
        %601 = vmatprep.mubr.bf16.mxu0 0
        %602 = vmatmul.mubr.bf16.gmra.mrb[0].mxu0 %v503
        %v603 = vpop.f32.mrb[0].mxu0
        %v604 = vadd.f32 0.0, %v603
        %v605 = vpop.f32.mrb[0].mxu0
        %v606 = vpop.f32.mrb[0].mxu0
        %v607 = vadd.f32 0.0, %v606
        %v608 = vpop.f32.mrb[0].mxu0
        %609 = vmatprep.mubr.bf16.mxu0 0
        %610 = vmatmul.mubr.bf16.gmra.mrb[0].mxu0 %v504
        %v611 = vpop.f32.mrb[0].mxu0
        %v612 = vadd.f32 0.0, %v611
        %v613 = vpop.f32.mrb[0].mxu0
        %v614 = vpop.f32.mrb[0].mxu0
        %v615 = vadd.f32 0.0, %v614
        %v616 = vpop.f32.mrb[0].mxu0
        %617 = vdwg.mxu0
        %v618 = vld [vmem:[%s334] sm:$0xff]
        %v619 = vld [vmem:[%s334 + $0x8] sm:$0xff]
        %v620 = vld [vmem:[%s334 + $0x10] sm:$0xff]
        %v621 = vld [vmem:[%s334 + $0x18] sm:$0xff]
        %v622 = vunpack.c.0.s8 %v618
        %v623 = vunpack.c.1.s8 %v618
        %v624 = vunpack.c.2.s8 %v618
        %v625 = vunpack.c.3.s8 %v618
        %v626 = vunpack.c.0.s8 %v619
        %v627 = vunpack.c.1.s8 %v619
        %v628 = vunpack.c.2.s8 %v619
        %v629 = vunpack.c.3.s8 %v619
        %v630 = vunpack.c.0.s8 %v620
        %v631 = vunpack.c.1.s8 %v620
        %v632 = vunpack.c.2.s8 %v620
        %v633 = vunpack.c.3.s8 %v620
        %v634 = vunpack.c.0.s8 %v621
        %v635 = vunpack.c.1.s8 %v621
        %v636 = vunpack.c.2.s8 %v621
        %v637 = vunpack.c.3.s8 %v621
        %v638 = vcvt.s32.f32 %v622
        %v639 = vcvt.s32.f32 %v623
        %v640 = vcvt.s32.f32 %v624
        %v641 = vcvt.s32.f32 %v625
        %v642 = vcvt.s32.f32 %v626
        %v643 = vcvt.s32.f32 %v627
        %v644 = vcvt.s32.f32 %v628
        %v645 = vcvt.s32.f32 %v629
        %v646 = vcvt.s32.f32 %v630
        %v647 = vcvt.s32.f32 %v631
        %v648 = vcvt.s32.f32 %v632
        %v649 = vcvt.s32.f32 %v633
        %v650 = vcvt.s32.f32 %v634
        %v651 = vcvt.s32.f32 %v635
        %v652 = vcvt.s32.f32 %v636
        %v653 = vcvt.s32.f32 %v637
        %vm654 = vcmp.ne.f32.partialorder %v638, 0.0
        %vm655 = vcmp.ne.f32.partialorder %v639, 0.0
        %vm656 = vcmp.ne.f32.partialorder %v640, 0.0
        %vm657 = vcmp.ne.f32.partialorder %v641, 0.0
        %vm658 = vcmp.ne.f32.partialorder %v642, 0.0
        %vm659 = vcmp.ne.f32.partialorder %v643, 0.0
        %vm660 = vcmp.ne.f32.partialorder %v644, 0.0
        %vm661 = vcmp.ne.f32.partialorder %v645, 0.0
        %vm662 = vcmp.ne.f32.partialorder %v646, 0.0
        %vm663 = vcmp.ne.f32.partialorder %v647, 0.0
        %vm664 = vcmp.ne.f32.partialorder %v648, 0.0
        %vm665 = vcmp.ne.f32.partialorder %v649, 0.0
        %vm666 = vcmp.ne.f32.partialorder %v650, 0.0
        %vm667 = vcmp.ne.f32.partialorder %v651, 0.0
        %vm668 = vcmp.ne.f32.partialorder %v652, 0.0
        %vm669 = vcmp.ne.f32.partialorder %v653, 0.0
        %v670 = vsel %vm654, -3.4028235e+38, %v556
        %v671 = vsel %vm655, -3.4028235e+38, %v559
        %v672 = vsel %vm656, -3.4028235e+38, %v564
        %v673 = vsel %vm657, -3.4028235e+38, %v567
        %v674 = vsel %vm658, -3.4028235e+38, %v572
        %v675 = vsel %vm659, -3.4028235e+38, %v575
        %v676 = vsel %vm660, -3.4028235e+38, %v580
        %v677 = vsel %vm661, -3.4028235e+38, %v583
        %v678 = vsel %vm662, -3.4028235e+38, %v588
        %v679 = vsel %vm663, -3.4028235e+38, %v591
        %v680 = vsel %vm664, -3.4028235e+38, %v596
        %v681 = vsel %vm665, -3.4028235e+38, %v599
        %v682 = vsel %vm666, -3.4028235e+38, %v604
        %v683 = vsel %vm667, -3.4028235e+38, %v607
        %v684 = vsel %vm668, -3.4028235e+38, %v612
        %v685 = vsel %vm669, -3.4028235e+38, %v615
        %v686 = vld [vmem:[#allocation2] sm:$0xff]
        %v687 = vld [vmem:[#allocation2 + $0x8] sm:$0xff]
        %v688 = vld [vmem:[#allocation2 + $0x10] sm:$0xff]
        %v689 = vld [vmem:[#allocation2 + $0x18] sm:$0xff]
        %v690 = vld [vmem:[#allocation2 + $0x20] sm:$0xff]
        %v691 = vld [vmem:[#allocation2 + $0x28] sm:$0xff]
        %v692 = vld [vmem:[#allocation2 + $0x30] sm:$0xff]
        %v693 = vld [vmem:[#allocation2 + $0x38] sm:$0xff]
        %v694 = vld [vmem:[#allocation2 + $0x40] sm:$0xff]
        %v695 = vld [vmem:[#allocation2 + $0x48] sm:$0xff]
        %v696 = vld [vmem:[#allocation2 + $0x50] sm:$0xff]
        %v697 = vld [vmem:[#allocation2 + $0x58] sm:$0xff]
        %v698 = vld [vmem:[#allocation2 + $0x60] sm:$0xff]
        %v699 = vld [vmem:[#allocation2 + $0x68] sm:$0xff]
        %v700 = vld [vmem:[#allocation2 + $0x70] sm:$0xff]
        %v701 = vld [vmem:[#allocation2 + $0x78] sm:$0xff]
        %702 = vmax.xlane.f32.xlu0 %v670
        %v703 = vpop.xlane.xlu0 %702
        %704 = vmax.xlane.f32.xlu0 %v671
        %v705 = vpop.xlane.xlu0 %704
        %706 = vmax.xlane.f32.xlu0 %v672
        %v707 = vpop.xlane.xlu0 %706
        %708 = vmax.xlane.f32.xlu0 %v673
        %v709 = vpop.xlane.xlu0 %708
        %710 = vmax.xlane.f32.xlu0 %v674
        %v711 = vpop.xlane.xlu0 %710
        %712 = vmax.xlane.f32.xlu0 %v675
        %v713 = vpop.xlane.xlu0 %712
        %714 = vmax.xlane.f32.xlu0 %v676
        %v715 = vpop.xlane.xlu0 %714
        %716 = vmax.xlane.f32.xlu0 %v677
        %v717 = vpop.xlane.xlu0 %716
        %718 = vmax.xlane.f32.xlu0 %v678
        %v719 = vpop.xlane.xlu0 %718
        %720 = vmax.xlane.f32.xlu0 %v679
        %v721 = vpop.xlane.xlu0 %720
        %722 = vmax.xlane.f32.xlu0 %v680
        %v723 = vpop.xlane.xlu0 %722
        %724 = vmax.xlane.f32.xlu0 %v681
        %v725 = vpop.xlane.xlu0 %724
        %726 = vmax.xlane.f32.xlu0 %v682
        %v727 = vpop.xlane.xlu0 %726
        %728 = vmax.xlane.f32.xlu0 %v683
        %v729 = vpop.xlane.xlu0 %728
        %730 = vmax.xlane.f32.xlu0 %v684
        %v731 = vpop.xlane.xlu0 %730
        %732 = vmax.xlane.f32.xlu0 %v685
        %v733 = vpop.xlane.xlu0 %732
        %v734 = vmax.f32 %v686, %v703
        %v735 = vmax.f32 %v687, %v705
        %v736 = vmax.f32 %v688, %v707
        %v737 = vmax.f32 %v689, %v709
        %v738 = vmax.f32 %v690, %v711
        %v739 = vmax.f32 %v691, %v713
        %v740 = vmax.f32 %v692, %v715
        %v741 = vmax.f32 %v693, %v717
        %v742 = vmax.f32 %v694, %v719
        %v743 = vmax.f32 %v695, %v721
        %v744 = vmax.f32 %v696, %v723
        %v745 = vmax.f32 %v697, %v725
        %v746 = vmax.f32 %v698, %v727
        %v747 = vmax.f32 %v699, %v729
        %v748 = vmax.f32 %v700, %v731
        %v749 = vmax.f32 %v701, %v733
        %v750 = vsub.f32 %v686, %v734
        %v751 = vsub.f32 %v687, %v735
        %v752 = vsub.f32 %v688, %v736
        %v753 = vsub.f32 %v689, %v737
        %v754 = vsub.f32 %v690, %v738
        %v755 = vsub.f32 %v691, %v739
        %v756 = vsub.f32 %v692, %v740
        %v757 = vsub.f32 %v693, %v741
        %v758 = vsub.f32 %v694, %v742
        %v759 = vsub.f32 %v695, %v743
        %v760 = vsub.f32 %v696, %v744
        %v761 = vsub.f32 %v697, %v745
        %v762 = vsub.f32 %v698, %v746
        %v763 = vsub.f32 %v699, %v747
        %v764 = vsub.f32 %v700, %v748
        %v765 = vsub.f32 %v701, %v749
        %v766 = vmul.f32 %v750, 1.442695
        %v767 = vpow.pop %v766
        %v768 = vmul.f32 %v751, 1.442695
        %v769 = vpow.pop %v768
        %v770 = vmul.f32 %v752, 1.442695
        %v771 = vpow.pop %v770
        %v772 = vmul.f32 %v753, 1.442695
        %v773 = vpow.pop %v772
        %v774 = vmul.f32 %v754, 1.442695
        %v775 = vpow.pop %v774
        %v776 = vmul.f32 %v755, 1.442695
        %v777 = vpow.pop %v776
        %v778 = vmul.f32 %v756, 1.442695
        %v779 = vpow.pop %v778
        %v780 = vmul.f32 %v757, 1.442695
        %v781 = vpow.pop %v780
        %v782 = vmul.f32 %v758, 1.442695
        %v783 = vpow.pop %v782
        %v784 = vmul.f32 %v759, 1.442695
        %v785 = vpow.pop %v784
        %v786 = vmul.f32 %v760, 1.442695
        %v787 = vpow.pop %v786
        %v788 = vmul.f32 %v761, 1.442695
        %v789 = vpow.pop %v788
        %v790 = vmul.f32 %v762, 1.442695
        %v791 = vpow.pop %v790
        %v792 = vmul.f32 %v763, 1.442695
        %v793 = vpow.pop %v792
        %v794 = vmul.f32 %v764, 1.442695
        %v795 = vpow.pop %v794
        %v796 = vmul.f32 %v765, 1.442695
        %v797 = vpow.pop %v796
        %799 = vset.pattern.permute.xlu0 0
        %800 = vperm.xlu0 %799, %v734
        %v801 = vpop.permute.xlu0 %800
        %804 = vset.pattern.permute.xlu0 0
        %805 = vperm.xlu0 %804, %v735
        %v806 = vpop.permute.xlu0 %805
        %809 = vset.pattern.permute.xlu0 0
        %810 = vperm.xlu0 %809, %v736
        %v811 = vpop.permute.xlu0 %810
        %814 = vset.pattern.permute.xlu0 0
        %815 = vperm.xlu0 %814, %v737
        %v816 = vpop.permute.xlu0 %815
        %819 = vset.pattern.permute.xlu0 0
        %820 = vperm.xlu0 %819, %v738
        %v821 = vpop.permute.xlu0 %820
        %824 = vset.pattern.permute.xlu0 0
        %825 = vperm.xlu0 %824, %v739
        %v826 = vpop.permute.xlu0 %825
        %829 = vset.pattern.permute.xlu0 0
        %830 = vperm.xlu0 %829, %v740
        %v831 = vpop.permute.xlu0 %830
        %834 = vset.pattern.permute.xlu0 0
        %835 = vperm.xlu0 %834, %v741
        %v836 = vpop.permute.xlu0 %835
        %839 = vset.pattern.permute.xlu0 0
        %840 = vperm.xlu0 %839, %v742
        %v841 = vpop.permute.xlu0 %840
        %844 = vset.pattern.permute.xlu0 0
        %845 = vperm.xlu0 %844, %v743
        %v846 = vpop.permute.xlu0 %845
        %849 = vset.pattern.permute.xlu0 0
        %850 = vperm.xlu0 %849, %v744
        %v851 = vpop.permute.xlu0 %850
        %854 = vset.pattern.permute.xlu0 0
        %855 = vperm.xlu0 %854, %v745
        %v856 = vpop.permute.xlu0 %855
        %859 = vset.pattern.permute.xlu0 0
        %860 = vperm.xlu0 %859, %v746
        %v861 = vpop.permute.xlu0 %860
        %864 = vset.pattern.permute.xlu0 0
        %865 = vperm.xlu0 %864, %v747
        %v866 = vpop.permute.xlu0 %865
        %869 = vset.pattern.permute.xlu0 0
        %870 = vperm.xlu0 %869, %v748
        %v871 = vpop.permute.xlu0 %870
        %874 = vset.pattern.permute.xlu0 0
        %875 = vperm.xlu0 %874, %v749
        %v876 = vpop.permute.xlu0 %875
        %v878 = vsub.f32 %v670, %v801
        %v879 = vsub.f32 %v671, %v806
        %v880 = vsub.f32 %v672, %v811
        %v881 = vsub.f32 %v673, %v816
        %v882 = vsub.f32 %v674, %v821
        %v883 = vsub.f32 %v675, %v826
        %v884 = vsub.f32 %v676, %v831
        %v885 = vsub.f32 %v677, %v836
        %v886 = vsub.f32 %v678, %v841
        %v887 = vsub.f32 %v679, %v846
        %v888 = vsub.f32 %v680, %v851
        %v889 = vsub.f32 %v681, %v856
        %v890 = vsub.f32 %v682, %v861
        %v891 = vsub.f32 %v683, %v866
        %v892 = vsub.f32 %v684, %v871
        %v893 = vsub.f32 %v685, %v876
        %v894 = vmul.f32 %v878, 1.442695
        %v895 = vpow.pop %v894
        %v896 = vmul.f32 %v879, 1.442695
        %v897 = vpow.pop %v896
        %v898 = vmul.f32 %v880, 1.442695
        %v899 = vpow.pop %v898
        %v900 = vmul.f32 %v881, 1.442695
        %v901 = vpow.pop %v900
        %v902 = vmul.f32 %v882, 1.442695
        %v903 = vpow.pop %v902
        %v904 = vmul.f32 %v883, 1.442695
        %v905 = vpow.pop %v904
        %v906 = vmul.f32 %v884, 1.442695
        %v907 = vpow.pop %v906
        %v908 = vmul.f32 %v885, 1.442695
        %v909 = vpow.pop %v908
        %v910 = vmul.f32 %v886, 1.442695
        %v911 = vpow.pop %v910
        %v912 = vmul.f32 %v887, 1.442695
        %v913 = vpow.pop %v912
        %v914 = vmul.f32 %v888, 1.442695
        %v915 = vpow.pop %v914
        %v916 = vmul.f32 %v889, 1.442695
        %v917 = vpow.pop %v916
        %v918 = vmul.f32 %v890, 1.442695
        %v919 = vpow.pop %v918
        %v920 = vmul.f32 %v891, 1.442695
        %v921 = vpow.pop %v920
        %v922 = vmul.f32 %v892, 1.442695
        %v923 = vpow.pop %v922
        %v924 = vmul.f32 %v893, 1.442695
        %v925 = vpow.pop %v924
        %v926 = vld [vmem:[#allocation3] sm:$0xff]
        %v927 = vld [vmem:[#allocation3 + $0x8] sm:$0xff]
        %v928 = vld [vmem:[#allocation3 + $0x10] sm:$0xff]
        %v929 = vld [vmem:[#allocation3 + $0x18] sm:$0xff]
        %v930 = vld [vmem:[#allocation3 + $0x20] sm:$0xff]
        %v931 = vld [vmem:[#allocation3 + $0x28] sm:$0xff]
        %v932 = vld [vmem:[#allocation3 + $0x30] sm:$0xff]
        %v933 = vld [vmem:[#allocation3 + $0x38] sm:$0xff]
        %v934 = vld [vmem:[#allocation3 + $0x40] sm:$0xff]
        %v935 = vld [vmem:[#allocation3 + $0x48] sm:$0xff]
        %v936 = vld [vmem:[#allocation3 + $0x50] sm:$0xff]
        %v937 = vld [vmem:[#allocation3 + $0x58] sm:$0xff]
        %v938 = vld [vmem:[#allocation3 + $0x60] sm:$0xff]
        %v939 = vld [vmem:[#allocation3 + $0x68] sm:$0xff]
        %v940 = vld [vmem:[#allocation3 + $0x70] sm:$0xff]
        %v941 = vld [vmem:[#allocation3 + $0x78] sm:$0xff]
        %v942 = vmul.f32 %v767, %v926
        %v943 = vmul.f32 %v769, %v927
        %v944 = vmul.f32 %v771, %v928
        %v945 = vmul.f32 %v773, %v929
        %v946 = vmul.f32 %v775, %v930
        %v947 = vmul.f32 %v777, %v931
        %v948 = vmul.f32 %v779, %v932
        %v949 = vmul.f32 %v781, %v933
        %v950 = vmul.f32 %v783, %v934
        %v951 = vmul.f32 %v785, %v935
        %v952 = vmul.f32 %v787, %v936
        %v953 = vmul.f32 %v789, %v937
        %v954 = vmul.f32 %v791, %v938
        %v955 = vmul.f32 %v793, %v939
        %v956 = vmul.f32 %v795, %v940
        %v957 = vmul.f32 %v797, %v941
        %958 = vadd.xlane.f32.xlu0 %v895
        %v959 = vpop.xlane.xlu0 %958
        %960 = vadd.xlane.f32.xlu0 %v897
        %v961 = vpop.xlane.xlu0 %960
        %962 = vadd.xlane.f32.xlu0 %v899
        %v963 = vpop.xlane.xlu0 %962
        %964 = vadd.xlane.f32.xlu0 %v901
        %v965 = vpop.xlane.xlu0 %964
        %966 = vadd.xlane.f32.xlu0 %v903
        %v967 = vpop.xlane.xlu0 %966
        %968 = vadd.xlane.f32.xlu0 %v905
        %v969 = vpop.xlane.xlu0 %968
        %970 = vadd.xlane.f32.xlu0 %v907
        %v971 = vpop.xlane.xlu0 %970
        %972 = vadd.xlane.f32.xlu0 %v909
        %v973 = vpop.xlane.xlu0 %972
        %974 = vadd.xlane.f32.xlu0 %v911
        %v975 = vpop.xlane.xlu0 %974
        %976 = vadd.xlane.f32.xlu0 %v913
        %v977 = vpop.xlane.xlu0 %976
        %978 = vadd.xlane.f32.xlu0 %v915
        %v979 = vpop.xlane.xlu0 %978
        %980 = vadd.xlane.f32.xlu0 %v917
        %v981 = vpop.xlane.xlu0 %980
        %982 = vadd.xlane.f32.xlu0 %v919
        %v983 = vpop.xlane.xlu0 %982
        %984 = vadd.xlane.f32.xlu0 %v921
        %v985 = vpop.xlane.xlu0 %984
        %986 = vadd.xlane.f32.xlu0 %v923
        %v987 = vpop.xlane.xlu0 %986
        %988 = vadd.xlane.f32.xlu0 %v925
        %v989 = vpop.xlane.xlu0 %988
        %v990 = vadd.f32 %v942, %v959
        %v991 = vadd.f32 %v943, %v961
        %v992 = vadd.f32 %v944, %v963
        %v993 = vadd.f32 %v945, %v965
        %v994 = vadd.f32 %v946, %v967
        %v995 = vadd.f32 %v947, %v969
        %v996 = vadd.f32 %v948, %v971
        %v997 = vadd.f32 %v949, %v973
        %v998 = vadd.f32 %v950, %v975
        %v999 = vadd.f32 %v951, %v977
        %v1000 = vadd.f32 %v952, %v979
        %v1001 = vadd.f32 %v953, %v981
        %v1002 = vadd.f32 %v954, %v983
        %v1003 = vadd.f32 %v955, %v985
        %v1004 = vadd.f32 %v956, %v987
        %v1005 = vadd.f32 %v957, %v989
        %vm1006 = vcmask 7168
        %1007 = vst.msk [vmem:[#allocation3] sm:$0xff] %vm1006, %v990
        %1008 = vst.msk [vmem:[#allocation3 + $0x8] sm:$0xff] %vm1006, %v991
        %1009 = vst.msk [vmem:[#allocation3 + $0x10] sm:$0xff] %vm1006, %v992
        %1010 = vst.msk [vmem:[#allocation3 + $0x18] sm:$0xff] %vm1006, %v993
        %1011 = vst.msk [vmem:[#allocation3 + $0x20] sm:$0xff] %vm1006, %v994
        %1012 = vst.msk [vmem:[#allocation3 + $0x28] sm:$0xff] %vm1006, %v995
        %1013 = vst.msk [vmem:[#allocation3 + $0x30] sm:$0xff] %vm1006, %v996
        %1014 = vst.msk [vmem:[#allocation3 + $0x38] sm:$0xff] %vm1006, %v997
        %1015 = vst.msk [vmem:[#allocation3 + $0x40] sm:$0xff] %vm1006, %v998
        %1016 = vst.msk [vmem:[#allocation3 + $0x48] sm:$0xff] %vm1006, %v999
        %1017 = vst.msk [vmem:[#allocation3 + $0x50] sm:$0xff] %vm1006, %v1000
        %1018 = vst.msk [vmem:[#allocation3 + $0x58] sm:$0xff] %vm1006, %v1001
        %1019 = vst.msk [vmem:[#allocation3 + $0x60] sm:$0xff] %vm1006, %v1002
        %1020 = vst.msk [vmem:[#allocation3 + $0x68] sm:$0xff] %vm1006, %v1003
        %1021 = vst.msk [vmem:[#allocation3 + $0x70] sm:$0xff] %vm1006, %v1004
        %1022 = vst.msk [vmem:[#allocation3 + $0x78] sm:$0xff] %vm1006, %v1005
        %v1023 = vpack.c.bf16 %v897, %v895
        %v1024 = vpack.c.bf16 %v901, %v899
        %v1025 = vpack.c.bf16 %v905, %v903
        %v1026 = vpack.c.bf16 %v909, %v907
        %v1027 = vpack.c.bf16 %v913, %v911
        %v1028 = vpack.c.bf16 %v917, %v915
        %v1029 = vpack.c.bf16 %v921, %v919
        %v1030 = vpack.c.bf16 %v925, %v923
        %v1031 = vld [vmem:[#allocation4] sm:$0xff]
        %v1032 = vld [vmem:[#allocation4 + $0x8] sm:$0xff]
        %v1033 = vld [vmem:[#allocation4 + $0x10] sm:$0xff]
        %v1034 = vld [vmem:[#allocation4 + $0x18] sm:$0xff]
        %v1035 = vld [vmem:[#allocation4 + $0x20] sm:$0xff]
        %v1036 = vld [vmem:[#allocation4 + $0x28] sm:$0xff]
        %v1037 = vld [vmem:[#allocation4 + $0x30] sm:$0xff]
        %v1038 = vld [vmem:[#allocation4 + $0x38] sm:$0xff]
        %v1039 = vld [vmem:[#allocation4 + $0x40] sm:$0xff]
        %v1040 = vld [vmem:[#allocation4 + $0x48] sm:$0xff]
        %v1041 = vld [vmem:[#allocation4 + $0x50] sm:$0xff]
        %v1042 = vld [vmem:[#allocation4 + $0x58] sm:$0xff]
        %v1043 = vld [vmem:[#allocation4 + $0x60] sm:$0xff]
        %v1044 = vld [vmem:[#allocation4 + $0x68] sm:$0xff]
        %v1045 = vld [vmem:[#allocation4 + $0x70] sm:$0xff]
        %v1046 = vld [vmem:[#allocation4 + $0x78] sm:$0xff]
        %1048 = vset.pattern.permute.xlu0 0
        %1049 = vperm.xlu0 %1048, %v767
        %v1050 = vpop.permute.xlu0 %1049
        %1053 = vset.pattern.permute.xlu0 0
        %1054 = vperm.xlu0 %1053, %v769
        %v1055 = vpop.permute.xlu0 %1054
        %1058 = vset.pattern.permute.xlu0 0
        %1059 = vperm.xlu0 %1058, %v771
        %v1060 = vpop.permute.xlu0 %1059
        %1063 = vset.pattern.permute.xlu0 0
        %1064 = vperm.xlu0 %1063, %v773
        %v1065 = vpop.permute.xlu0 %1064
        %1068 = vset.pattern.permute.xlu0 0
        %1069 = vperm.xlu0 %1068, %v775
        %v1070 = vpop.permute.xlu0 %1069
        %1073 = vset.pattern.permute.xlu0 0
        %1074 = vperm.xlu0 %1073, %v777
        %v1075 = vpop.permute.xlu0 %1074
        %1078 = vset.pattern.permute.xlu0 0
        %1079 = vperm.xlu0 %1078, %v779
        %v1080 = vpop.permute.xlu0 %1079
        %1083 = vset.pattern.permute.xlu0 0
        %1084 = vperm.xlu0 %1083, %v781
        %v1085 = vpop.permute.xlu0 %1084
        %1088 = vset.pattern.permute.xlu0 0
        %1089 = vperm.xlu0 %1088, %v783
        %v1090 = vpop.permute.xlu0 %1089
        %1093 = vset.pattern.permute.xlu0 0
        %1094 = vperm.xlu0 %1093, %v785
        %v1095 = vpop.permute.xlu0 %1094
        %1098 = vset.pattern.permute.xlu0 0
        %1099 = vperm.xlu0 %1098, %v787
        %v1100 = vpop.permute.xlu0 %1099
        %1103 = vset.pattern.permute.xlu0 0
        %1104 = vperm.xlu0 %1103, %v789
        %v1105 = vpop.permute.xlu0 %1104
        %1108 = vset.pattern.permute.xlu0 0
        %1109 = vperm.xlu0 %1108, %v791
        %v1110 = vpop.permute.xlu0 %1109
        %1113 = vset.pattern.permute.xlu0 0
        %1114 = vperm.xlu0 %1113, %v793
        %v1115 = vpop.permute.xlu0 %1114
        %1118 = vset.pattern.permute.xlu0 0
        %1119 = vperm.xlu0 %1118, %v795
        %v1120 = vpop.permute.xlu0 %1119
        %1123 = vset.pattern.permute.xlu0 0
        %1124 = vperm.xlu0 %1123, %v797
        %v1125 = vpop.permute.xlu0 %1124
        %v1127 = vmul.f32 %v1050, %v1031
        %v1128 = vmul.f32 %v1055, %v1032
        %v1129 = vmul.f32 %v1060, %v1033
        %v1130 = vmul.f32 %v1065, %v1034
        %v1131 = vmul.f32 %v1070, %v1035
        %v1132 = vmul.f32 %v1075, %v1036
        %v1133 = vmul.f32 %v1080, %v1037
        %v1134 = vmul.f32 %v1085, %v1038
        %v1135 = vmul.f32 %v1090, %v1039
        %v1136 = vmul.f32 %v1095, %v1040
        %v1137 = vmul.f32 %v1100, %v1041
        %v1138 = vmul.f32 %v1105, %v1042
        %v1139 = vmul.f32 %v1110, %v1043
        %v1140 = vmul.f32 %v1115, %v1044
        %v1141 = vmul.f32 %v1120, %v1045
        %v1142 = vmul.f32 %v1125, %v1046
        %1143 = vmatprep.subr.bf16.mxu0 0
        %1144 = vmatpush1.bf16.msra.mxu0 %v513
        %1145 = vmatprep.subr.bf16.mxu0 0
        %1146 = vmatpush1.bf16.msra.mxu0 %v514
        %1147 = vmatprep.subr.bf16.mxu0 0
        %1148 = vmatpush1.bf16.msra.mxu0 %v515
        %1149 = vmatprep.subr.bf16.mxu0 0
        %1150 = vmatpush1.bf16.msra.mxu0 %v516
        %1151 = vmatprep.subr.bf16.mxu0 0
        %1152 = vmatpush1.bf16.msra.mxu0 %v517
        %1153 = vmatprep.subr.bf16.mxu0 0
        %1154 = vmatpush1.bf16.msra.mxu0 %v518
        %1155 = vmatprep.subr.bf16.mxu0 0
        %1156 = vmatpush1.bf16.msra.mxu0 %v519
        %1157 = vmatprep.subr.bf16.mxu0 0
        %1158 = vmatpush1.bf16.msra.mxu0 %v520
        %1159 = vmatprep.subr.bf16.mxu0 0
        %1160 = vmatpush1.bf16.msra.mxu0 0
        %1161 = vmatprep.subr.bf16.mxu0 0
        %1162 = vmatpush1.bf16.msra.mxu0 0
        %1163 = vmatprep.subr.bf16.mxu0 0
        %1164 = vmatpush1.bf16.msra.mxu0 0
        %1165 = vmatprep.subr.bf16.mxu0 0
        %1166 = vmatpush1.bf16.msra.mxu0 0
        %1167 = vmatprep.subr.bf16.mxu0 0
        %1168 = vmatpush1.bf16.msra.mxu0 0
        %1169 = vmatprep.subr.bf16.mxu0 0
        %1170 = vmatpush1.bf16.msra.mxu0 0
        %1171 = vmatprep.subr.bf16.mxu0 0
        %1172 = vmatpush1.bf16.msra.mxu0 0
        %1173 = vmatprep.subr.bf16.mxu0 0
        %1174 = vmatpush1.bf16.msra.mxu0 0
        %1175 = vmatprep.mubr.bf16.mxu0 0
        %1176 = vmatmul.mubr.bf16.gmra.mrb[0].mxu0 %v1023
        %v1177 = vpop.f32.mrb[0].mxu0
        %v1178 = vadd.f32 0.0, %v1177
        %v1179 = vpop.f32.mrb[0].mxu0
        %v1180 = vpop.f32.mrb[0].mxu0
        %v1181 = vadd.f32 0.0, %v1180
        %v1182 = vpop.f32.mrb[0].mxu0
        %1183 = vmatprep.mubr.bf16.mxu0 0
        %1184 = vmatmul.mubr.bf16.gmra.mrb[0].mxu0 %v1024
        %v1185 = vpop.f32.mrb[0].mxu0
        %v1186 = vadd.f32 0.0, %v1185
        %v1187 = vpop.f32.mrb[0].mxu0
        %v1188 = vpop.f32.mrb[0].mxu0
        %v1189 = vadd.f32 0.0, %v1188
        %v1190 = vpop.f32.mrb[0].mxu0
        %1191 = vmatprep.mubr.bf16.mxu0 0
        %1192 = vmatmul.mubr.bf16.gmra.mrb[0].mxu0 %v1025
        %v1193 = vpop.f32.mrb[0].mxu0
        %v1194 = vadd.f32 0.0, %v1193
        %v1195 = vpop.f32.mrb[0].mxu0
        %v1196 = vpop.f32.mrb[0].mxu0
        %v1197 = vadd.f32 0.0, %v1196
        %v1198 = vpop.f32.mrb[0].mxu0
        %1199 = vmatprep.mubr.bf16.mxu0 0
        %1200 = vmatmul.mubr.bf16.gmra.mrb[0].mxu0 %v1026
        %v1201 = vpop.f32.mrb[0].mxu0
        %v1202 = vadd.f32 0.0, %v1201
        %v1203 = vpop.f32.mrb[0].mxu0
        %v1204 = vpop.f32.mrb[0].mxu0
        %v1205 = vadd.f32 0.0, %v1204
        %v1206 = vpop.f32.mrb[0].mxu0
        %1207 = vmatprep.mubr.bf16.mxu0 0
        %1208 = vmatmul.mubr.bf16.gmra.mrb[0].mxu0 %v1027
        %v1209 = vpop.f32.mrb[0].mxu0
        %v1210 = vadd.f32 0.0, %v1209
        %v1211 = vpop.f32.mrb[0].mxu0
        %v1212 = vpop.f32.mrb[0].mxu0
        %v1213 = vadd.f32 0.0, %v1212
        %v1214 = vpop.f32.mrb[0].mxu0
        %1215 = vmatprep.mubr.bf16.mxu0 0
        %1216 = vmatmul.mubr.bf16.gmra.mrb[0].mxu0 %v1028
        %v1217 = vpop.f32.mrb[0].mxu0
        %v1218 = vadd.f32 0.0, %v1217
        %v1219 = vpop.f32.mrb[0].mxu0
        %v1220 = vpop.f32.mrb[0].mxu0
        %v1221 = vadd.f32 0.0, %v1220
        %v1222 = vpop.f32.mrb[0].mxu0
        %1223 = vmatprep.mubr.bf16.mxu0 0
        %1224 = vmatmul.mubr.bf16.gmra.mrb[0].mxu0 %v1029
        %v1225 = vpop.f32.mrb[0].mxu0
        %v1226 = vadd.f32 0.0, %v1225
        %v1227 = vpop.f32.mrb[0].mxu0
        %v1228 = vpop.f32.mrb[0].mxu0
        %v1229 = vadd.f32 0.0, %v1228
        %v1230 = vpop.f32.mrb[0].mxu0
        %1231 = vmatprep.mubr.bf16.mxu0 0
        %1232 = vmatmul.mubr.bf16.gmra.mrb[0].mxu0 %v1030
        %v1233 = vpop.f32.mrb[0].mxu0
        %v1234 = vadd.f32 0.0, %v1233
        %v1235 = vpop.f32.mrb[0].mxu0
        %v1236 = vpop.f32.mrb[0].mxu0
        %v1237 = vadd.f32 0.0, %v1236
        %v1238 = vpop.f32.mrb[0].mxu0
        %1239 = vdwg.mxu0
        %v1240 = vadd.f32 %v1127, %v1178
        %v1241 = vadd.f32 %v1128, %v1181
        %v1242 = vadd.f32 %v1129, %v1186
        %v1243 = vadd.f32 %v1130, %v1189
        %v1244 = vadd.f32 %v1131, %v1194
        %v1245 = vadd.f32 %v1132, %v1197
        %v1246 = vadd.f32 %v1133, %v1202
        %v1247 = vadd.f32 %v1134, %v1205
        %v1248 = vadd.f32 %v1135, %v1210
        %v1249 = vadd.f32 %v1136, %v1213
        %v1250 = vadd.f32 %v1137, %v1218
        %v1251 = vadd.f32 %v1138, %v1221
        %v1252 = vadd.f32 %v1139, %v1226
        %v1253 = vadd.f32 %v1140, %v1229
        %v1254 = vadd.f32 %v1141, %v1234
        %v1255 = vadd.f32 %v1142, %v1237
        %1256 = vst [vmem:[#allocation4] sm:$0xff] %v1240
        %1257 = vst [vmem:[#allocation4 + $0x8] sm:$0xff] %v1241
        %1258 = vst [vmem:[#allocation4 + $0x10] sm:$0xff] %v1242
        %1259 = vst [vmem:[#allocation4 + $0x18] sm:$0xff] %v1243
        %1260 = vst [vmem:[#allocation4 + $0x20] sm:$0xff] %v1244
        %1261 = vst [vmem:[#allocation4 + $0x28] sm:$0xff] %v1245
        %1262 = vst [vmem:[#allocation4 + $0x30] sm:$0xff] %v1246
        %1263 = vst [vmem:[#allocation4 + $0x38] sm:$0xff] %v1247
        %1264 = vst [vmem:[#allocation4 + $0x40] sm:$0xff] %v1248
        %1265 = vst [vmem:[#allocation4 + $0x48] sm:$0xff] %v1249
        %1266 = vst [vmem:[#allocation4 + $0x50] sm:$0xff] %v1250
        %1267 = vst [vmem:[#allocation4 + $0x58] sm:$0xff] %v1251
        %1268 = vst [vmem:[#allocation4 + $0x60] sm:$0xff] %v1252
        %1269 = vst [vmem:[#allocation4 + $0x68] sm:$0xff] %v1253
        %1270 = vst [vmem:[#allocation4 + $0x70] sm:$0xff] %v1254
        %1271 = vst [vmem:[#allocation4 + $0x78] sm:$0xff] %v1255
        %1272 = vst.msk [vmem:[#allocation2] sm:$0xff] %vm1006, %v734
        %1273 = vst.msk [vmem:[#allocation2 + $0x8] sm:$0xff] %vm1006, %v735
        %1274 = vst.msk [vmem:[#allocation2 + $0x10] sm:$0xff] %vm1006, %v736
        %1275 = vst.msk [vmem:[#allocation2 + $0x18] sm:$0xff] %vm1006, %v737
        %1276 = vst.msk [vmem:[#allocation2 + $0x20] sm:$0xff] %vm1006, %v738
        %1277 = vst.msk [vmem:[#allocation2 + $0x28] sm:$0xff] %vm1006, %v739
        %1278 = vst.msk [vmem:[#allocation2 + $0x30] sm:$0xff] %vm1006, %v740
        %1279 = vst.msk [vmem:[#allocation2 + $0x38] sm:$0xff] %vm1006, %v741
        %1280 = vst.msk [vmem:[#allocation2 + $0x40] sm:$0xff] %vm1006, %v742
        %1281 = vst.msk [vmem:[#allocation2 + $0x48] sm:$0xff] %vm1006, %v743
        %1282 = vst.msk [vmem:[#allocation2 + $0x50] sm:$0xff] %vm1006, %v744
        %1283 = vst.msk [vmem:[#allocation2 + $0x58] sm:$0xff] %vm1006, %v745
        %1284 = vst.msk [vmem:[#allocation2 + $0x60] sm:$0xff] %vm1006, %v746
        %1285 = vst.msk [vmem:[#allocation2 + $0x68] sm:$0xff] %vm1006, %v747
        %1286 = vst.msk [vmem:[#allocation2 + $0x70] sm:$0xff] %vm1006, %v748
        %1287 = vst.msk [vmem:[#allocation2 + $0x78] sm:$0xff] %vm1006, %v749
        %p1288 = scmp.eq.s32.totalorder %s34, 1
        // Predicated region
        $region57: #{tpu_custom_call.1} parent=35 // pred_check
          %p1289 = pneg %p1288
        $region58: #{tpu_custom_call.1} parent=35 // pred_check_branch
          %1291 = sbr.rel (%p1289) target = $region60
        $region59: #{tpu_custom_call.1} parent=35 // pred_region
          %v1292 = vld [vmem:[#allocation3] sm:$0xff]
          %v1293 = vld [vmem:[#allocation3 + $0x8] sm:$0xff]
          %v1294 = vld [vmem:[#allocation3 + $0x10] sm:$0xff]
          %v1295 = vld [vmem:[#allocation3 + $0x18] sm:$0xff]
          %v1296 = vld [vmem:[#allocation3 + $0x20] sm:$0xff]
          %v1297 = vld [vmem:[#allocation3 + $0x28] sm:$0xff]
          %v1298 = vld [vmem:[#allocation3 + $0x30] sm:$0xff]
          %v1299 = vld [vmem:[#allocation3 + $0x38] sm:$0xff]
          %v1300 = vld [vmem:[#allocation3 + $0x40] sm:$0xff]
          %v1301 = vld [vmem:[#allocation3 + $0x48] sm:$0xff]
          %v1302 = vld [vmem:[#allocation3 + $0x50] sm:$0xff]
          %v1303 = vld [vmem:[#allocation3 + $0x58] sm:$0xff]
          %v1304 = vld [vmem:[#allocation3 + $0x60] sm:$0xff]
          %v1305 = vld [vmem:[#allocation3 + $0x68] sm:$0xff]
          %v1306 = vld [vmem:[#allocation3 + $0x70] sm:$0xff]
          %v1307 = vld [vmem:[#allocation3 + $0x78] sm:$0xff]
          %v1308 = vrcp.pop %v1292
          %v1309 = vrcp.pop %v1293
          %v1310 = vrcp.pop %v1294
          %v1311 = vrcp.pop %v1295
          %v1312 = vrcp.pop %v1296
          %v1313 = vrcp.pop %v1297
          %v1314 = vrcp.pop %v1298
          %v1315 = vrcp.pop %v1299
          %v1316 = vrcp.pop %v1300
          %v1317 = vrcp.pop %v1301
          %v1318 = vrcp.pop %v1302
          %v1319 = vrcp.pop %v1303
          %v1320 = vrcp.pop %v1304
          %v1321 = vrcp.pop %v1305
          %v1322 = vrcp.pop %v1306
          %v1323 = vrcp.pop %v1307
          %v1324 = vld [vmem:[#allocation4] sm:$0xff]
          %v1325 = vld [vmem:[#allocation4 + $0x8] sm:$0xff]
          %v1326 = vld [vmem:[#allocation4 + $0x10] sm:$0xff]
          %v1327 = vld [vmem:[#allocation4 + $0x18] sm:$0xff]
          %v1328 = vld [vmem:[#allocation4 + $0x20] sm:$0xff]
          %v1329 = vld [vmem:[#allocation4 + $0x28] sm:$0xff]
          %v1330 = vld [vmem:[#allocation4 + $0x30] sm:$0xff]
          %v1331 = vld [vmem:[#allocation4 + $0x38] sm:$0xff]
          %v1332 = vld [vmem:[#allocation4 + $0x40] sm:$0xff]
          %v1333 = vld [vmem:[#allocation4 + $0x48] sm:$0xff]
          %v1334 = vld [vmem:[#allocation4 + $0x50] sm:$0xff]
          %v1335 = vld [vmem:[#allocation4 + $0x58] sm:$0xff]
          %v1336 = vld [vmem:[#allocation4 + $0x60] sm:$0xff]
          %v1337 = vld [vmem:[#allocation4 + $0x68] sm:$0xff]
          %v1338 = vld [vmem:[#allocation4 + $0x70] sm:$0xff]
          %v1339 = vld [vmem:[#allocation4 + $0x78] sm:$0xff]
          %1341 = vset.pattern.permute.xlu0 0
          %1342 = vperm.xlu0 %1341, %v1308
          %v1343 = vpop.permute.xlu0 %1342
          %1346 = vset.pattern.permute.xlu0 0
          %1347 = vperm.xlu0 %1346, %v1309
          %v1348 = vpop.permute.xlu0 %1347
          %1351 = vset.pattern.permute.xlu0 0
          %1352 = vperm.xlu0 %1351, %v1310
          %v1353 = vpop.permute.xlu0 %1352
          %1356 = vset.pattern.permute.xlu0 0
          %1357 = vperm.xlu0 %1356, %v1311
          %v1358 = vpop.permute.xlu0 %1357
          %1361 = vset.pattern.permute.xlu0 0
          %1362 = vperm.xlu0 %1361, %v1312
          %v1363 = vpop.permute.xlu0 %1362
          %1366 = vset.pattern.permute.xlu0 0
          %1367 = vperm.xlu0 %1366, %v1313
          %v1368 = vpop.permute.xlu0 %1367
          %1371 = vset.pattern.permute.xlu0 0
          %1372 = vperm.xlu0 %1371, %v1314
          %v1373 = vpop.permute.xlu0 %1372
          %1376 = vset.pattern.permute.xlu0 0
          %1377 = vperm.xlu0 %1376, %v1315
          %v1378 = vpop.permute.xlu0 %1377
          %1381 = vset.pattern.permute.xlu0 0
          %1382 = vperm.xlu0 %1381, %v1316
          %v1383 = vpop.permute.xlu0 %1382
          %1386 = vset.pattern.permute.xlu0 0
          %1387 = vperm.xlu0 %1386, %v1317
          %v1388 = vpop.permute.xlu0 %1387
          %1391 = vset.pattern.permute.xlu0 0
          %1392 = vperm.xlu0 %1391, %v1318
          %v1393 = vpop.permute.xlu0 %1392
          %1396 = vset.pattern.permute.xlu0 0
          %1397 = vperm.xlu0 %1396, %v1319
          %v1398 = vpop.permute.xlu0 %1397
          %1401 = vset.pattern.permute.xlu0 0
          %1402 = vperm.xlu0 %1401, %v1320
          %v1403 = vpop.permute.xlu0 %1402
          %1406 = vset.pattern.permute.xlu0 0
          %1407 = vperm.xlu0 %1406, %v1321
          %v1408 = vpop.permute.xlu0 %1407
          %1411 = vset.pattern.permute.xlu0 0
          %1412 = vperm.xlu0 %1411, %v1322
          %v1413 = vpop.permute.xlu0 %1412
          %1416 = vset.pattern.permute.xlu0 0
          %1417 = vperm.xlu0 %1416, %v1323
          %v1418 = vpop.permute.xlu0 %1417
          %v1420 = vmul.f32 %v1324, %v1343
          %v1421 = vmul.f32 %v1325, %v1348
          %v1422 = vmul.f32 %v1326, %v1353
          %v1423 = vmul.f32 %v1327, %v1358
          %v1424 = vmul.f32 %v1328, %v1363
          %v1425 = vmul.f32 %v1329, %v1368
          %v1426 = vmul.f32 %v1330, %v1373
          %v1427 = vmul.f32 %v1331, %v1378
          %v1428 = vmul.f32 %v1332, %v1383
          %v1429 = vmul.f32 %v1333, %v1388
          %v1430 = vmul.f32 %v1334, %v1393
          %v1431 = vmul.f32 %v1335, %v1398
          %v1432 = vmul.f32 %v1336, %v1403
          %v1433 = vmul.f32 %v1337, %v1408
          %v1434 = vmul.f32 %v1338, %v1413
          %v1435 = vmul.f32 %v1339, %v1418
          %1436 = vst [vmem:[%s373] sm:$0xff] %v1420
          %1437 = vst [vmem:[%s373 + $0x8] sm:$0xff] %v1421
          %1438 = vst [vmem:[%s373 + $0x10] sm:$0xff] %v1422
          %1439 = vst [vmem:[%s373 + $0x18] sm:$0xff] %v1423
          %1440 = vst [vmem:[%s373 + $0x20] sm:$0xff] %v1424
          %1441 = vst [vmem:[%s373 + $0x28] sm:$0xff] %v1425
          %1442 = vst [vmem:[%s373 + $0x30] sm:$0xff] %v1426
          %1443 = vst [vmem:[%s373 + $0x38] sm:$0xff] %v1427
          %1444 = vst [vmem:[%s373 + $0x40] sm:$0xff] %v1428
          %1445 = vst [vmem:[%s373 + $0x48] sm:$0xff] %v1429
          %1446 = vst [vmem:[%s373 + $0x50] sm:$0xff] %v1430
          %1447 = vst [vmem:[%s373 + $0x58] sm:$0xff] %v1431
          %1448 = vst [vmem:[%s373 + $0x60] sm:$0xff] %v1432
          %1449 = vst [vmem:[%s373 + $0x68] sm:$0xff] %v1433
          %1450 = vst [vmem:[%s373 + $0x70] sm:$0xff] %v1434
          %1451 = vst [vmem:[%s373 + $0x78] sm:$0xff] %v1435
        $region60: #{tpu_custom_call.1} parent=35 // pred_fallthru
          _
        %s1452 = sand.u32 %s170, 1
        %s1453 = scalar_lea.sflag [#allocation7], %s1452
        %s1454 = sand.u32 %s170, 1
        %s1455 = smul.addr %s1454, 128
        %s1456 = scalar_lea.vmem [#allocation13], %s1455
        // Predicated region
        $region61: #{tpu_custom_call.1} parent=35 // pred_check
          %p1457 = pneg %p180
        $region62: #{tpu_custom_call.1} parent=35 // pred_check_branch
          %1459 = sbr.rel (%p1457) target = $region64
        $region63: #{tpu_custom_call.1} parent=35 // pred_region
          %s1460 = smul.u32 16, %s33
          %s1462 = ssub.s32 2048, 2048
          %1463 = vsyncadd %s1453, %s1462
          %s1464 = smul.addr %s32, 32
          %s1465 = sadd.s32 %s1460, %s1464
          %s1466 = smul.addr %s1465, 128
          %s1467 = scalar_lea.hbm %s4, %s1466
          %s1468 = sshll.u32 %s1456, 4
          %s1469 = int_to_ptr.vmem [resolvable:$true] %s1468
          %1474 = dma.vmem_to_hbm [thread:$0]  %s1469, 2048, %s1467, %s1453, 128, 128, 8
        $region64: #{tpu_custom_call.1} parent=35 // pred_fallthru
          _
      $region36: #{tpu_custom_call.1} parent=5 // pred_fallthru
        _
      %p1475 = scmp.le.s32.totalorder 2, %s22
      // Predicated region
      $region65: #{tpu_custom_call.1} parent=5 // pred_check
        %p1476 = pneg %p1475
      $region66: #{tpu_custom_call.1} parent=5 // pred_check_branch
        %1478 = sbr.rel (%p1476) target = $region68
      $region67: #{tpu_custom_call.1} parent=5 // pred_region
        %s1479 = ssub.s32 %s22, 2
        // Predicated region
        $region69: #{tpu_custom_call.1} parent=67 // pred_check
          %p1480 = pneg %p186
        $region70: #{tpu_custom_call.1} parent=67 // pred_check_branch
          %1482 = sbr.rel (%p1480) target = $region72
        $region71: #{tpu_custom_call.1} parent=67 // pred_region
          %s1483 = sand.u32 %s171, 1
          %s1484 = scalar_lea.sflag [#allocation7], %s1483
          %s1485 = sand.u32 %s171, 1
          %s1486 = smul.addr %s1485, 128
          %s1487 = scalar_lea.vmem [#allocation13], %s1486
          %1488 = dma.done %s1484, 2048
        $region72: #{tpu_custom_call.1} parent=67 // pred_fallthru
          _
      $region68: #{tpu_custom_call.1} parent=5 // pred_fallthru
        _
    $region6: #{tpu_custom_call.1} parent=1 // loop_footer
      %s26 = sadd.s32 1, %s22
    $region7: #{tpu_custom_call.1} parent=1 // loop_footer_branch
      %21 = sbr.rel target = $region3
    $region8: #{tpu_custom_call.1} parent=1 // loop_exit
      _
    %1489 = vsyncpa [#allocation6], 1
    %s1490 = scalar_lea.sflag [#allocation6], 1
    %1491 = vsyncpa %s1490, 1
    %1492 = vsyncpa [#allocation9], 1
    %s1493 = scalar_lea.sflag [#allocation9], 1
    %1494 = vsyncpa %s1493, 1
    %1495 = vsyncpa [#allocation12], 1
    %s1496 = scalar_lea.sflag [#allocation12], 1
    %1497 = vsyncpa %s1496, 1
    %1498 = vsyncpa [#allocation7], 1
    %s1499 = scalar_lea.sflag [#allocation7], 1
    %1500 = vsyncpa %s1499, 1

</llo_original>
